<compile_context>
chip_gen: v7x
topology: tpu7x:2x2x1
jax: 0.10.0
libtpu: 0.0.40
codegen_flags: <defaults>
</compile_context>

<pallas_src>
import functools

import jax
import jax.numpy as jnp
from jax import lax
from jax.experimental import pallas as pl
from jax.experimental.pallas import tpu as pltpu


def _mha_kernel(x_ref, wq_ref, wk_ref, wv_ref, wpT_ref, bp_ref, o_ref,
                *, num_heads, head_size, bb, T, C):
    """Fused multi-head causal attention + output projection for `bb` batch rows.

    x_ref   : (bb, T, Cp)  VMEM  bf16   (embedding dim zero-padded to Cp)
    wq_ref  : (Cp, C)      VMEM  bf16   (heads fused on output dim; scale folded in)
    wk_ref  : (Cp, C)      VMEM  bf16
    wv_ref  : (Cp, C)      VMEM  bf16
    wpT_ref : (C, Cp)      VMEM  bf16   (proj.weight^T, output dim padded to Cp)
    bp_ref  : (1, Cp)      VMEM  f32    (proj.bias, padded)
    o_ref   : (bb, T, Cp)  VMEM  f32
    """
    Cp = x_ref.shape[-1]
    x = x_ref[...].reshape(bb * T, Cp)                     # (bb*T, Cp) bf16

    # Heads fused into single wide MXU matmuls (N = C instead of hs per head).
    q = jnp.dot(x, wq_ref[...], preferred_element_type=jnp.float32)   # (bb*T, C)
    k = jnp.dot(x, wk_ref[...], preferred_element_type=jnp.float32)
    v = jnp.dot(x, wv_ref[...], preferred_element_type=jnp.float32)

    # Additive causal mask, finite negative (no NaNs for fully-masked rows).
    row = lax.broadcasted_iota(jnp.int32, (T, T), 0)
    col = lax.broadcasted_iota(jnp.int32, (T, T), 1)
    causal_bias = jnp.where(col <= row, 0.0, -1e30).astype(jnp.float32)

    rows_out = []
    for b in range(bb):                                    # static, small
        qb = q[b * T:(b + 1) * T]                          # (T, C)
        kb = k[b * T:(b + 1) * T]
        vb = v[b * T:(b + 1) * T]
        heads = []
        for h in range(num_heads):                         # static, small
            sl = slice(h * head_size, (h + 1) * head_size)
            qh, kh, vh = qb[:, sl], kb[:, sl], vb[:, sl]   # (T, hs) f32

            # scale already folded into Wq in the wrapper
            s = jnp.dot(qh, kh.T, preferred_element_type=jnp.float32) + causal_bias
            m = jnp.max(s, axis=-1, keepdims=True)
            p = jnp.exp(s - m)
            p = p * pl.reciprocal(jnp.sum(p, axis=-1, keepdims=True), approx=True)
            # TODO(synk): attention-weight dropout and output dropout are identity (eval mode).
            heads.append(jnp.dot(p, vh, preferred_element_type=jnp.float32))  # (T, hs)
        rows_out.append(jnp.concatenate(heads, axis=-1))   # (T, C)

    cat = jnp.concatenate(rows_out, axis=0)                # (bb*T, C) f32

    # Single output-projection matmul for all heads and all batch rows.
    y = jnp.dot(cat.astype(jnp.bfloat16), wpT_ref[...],
                preferred_element_type=jnp.float32) + bp_ref[...]   # (bb*T, Cp)

    o_ref[...] = y.reshape(bb, T, Cp).astype(o_ref.dtype)  # lane-dense store (Cp=128k)


def multi_head_attention(x, wq, wk, wv, w_proj, b_proj, *,
                         num_heads, head_size, block_b=None):
    """x: (B, T, C); wq/wk/wv: (H, C, hs); w_proj: (C, C) torch layout; b_proj: (C,)."""
    B, T, C = x.shape
    assert C == num_heads * head_size

    LANES = 128
    Cp = pl.cdiv(C, LANES) * LANES                         # lane-dense padded width

    if block_b is None:
        block_b = B if B <= 8 else 8
    while B % block_b:                                     # largest divisor of B
        block_b -= 1

    scale = head_size ** -0.5

    # Fuse heads along the output dim: (H, C, hs) -> (C, H*hs) = (C, C).
    wq_all = jnp.concatenate([wq[h] for h in range(num_heads)], axis=-1) * scale
    wk_all = jnp.concatenate([wk[h] for h in range(num_heads)], axis=-1)
    wv_all = jnp.concatenate([wv[h] for h in range(num_heads)], axis=-1)

    def pad_rows(w):                                       # (C, N) -> (Cp, N)
        return jnp.pad(w, ((0, Cp - C), (0, 0)))

    wq_p = pad_rows(wq_all).astype(jnp.bfloat16)
    wk_p = pad_rows(wk_all).astype(jnp.bfloat16)
    wv_p = pad_rows(wv_all).astype(jnp.bfloat16)

    wpT = w_proj.T                                         # y = concat @ W^T + b
    wpT_p = jnp.pad(wpT, ((0, 0), (0, Cp - C))).astype(jnp.bfloat16)   # (C, Cp)
    bp_p = jnp.pad(b_proj, (0, Cp - C)).reshape(1, Cp).astype(jnp.float32)

    x_p = jnp.pad(x, ((0, 0), (0, 0), (0, Cp - C))).astype(jnp.bfloat16)

    kernel = functools.partial(_mha_kernel, num_heads=num_heads,
                               head_size=head_size, bb=block_b, T=T, C=C)

    out_p = pl.pallas_call(
        kernel,
        out_shape=jax.ShapeDtypeStruct((B, T, Cp), x.dtype),
        grid_spec=pltpu.PrefetchScalarGridSpec(
            num_scalar_prefetch=0,
            grid=(B // block_b,),
            in_specs=[
                pl.BlockSpec((block_b, T, Cp), lambda i: (i, 0, 0)),
                pl.BlockSpec((Cp, C), lambda i: (0, 0)),
                pl.BlockSpec((Cp, C), lambda i: (0, 0)),
                pl.BlockSpec((Cp, C), lambda i: (0, 0)),
                pl.BlockSpec((C, Cp), lambda i: (0, 0)),
                pl.BlockSpec((1, Cp), lambda i: (0, 0)),
            ],
            out_specs=pl.BlockSpec((block_b, T, Cp), lambda i: (i, 0, 0)),
        ),
        compiler_params=pltpu.CompilerParams(
            dimension_semantics=("parallel",)),
    )(x_p, wq_p, wk_p, wv_p, wpT_p, bp_p)

    return out_p[:, :, :C]                                 # drop lane padding


def _reference(x, wq, wk, wv, w_proj, b_proj, *, num_heads, head_size):
    """Pure-JAX f32 reference mirroring the PyTorch module (eval mode)."""
    B, T, C = x.shape
    row = jnp.arange(T)[:, None]
    col = jnp.arange(T)[None, :]
    causal = col <= row
    outs = []
    for h in range(num_heads):
        q = x @ wq[h]
        k = x @ wk[h]
        v = x @ wv[h]
        s = (q @ jnp.swapaxes(k, -2, -1)) * head_size ** -0.5
        s = jnp.where(causal, s, -jnp.inf)
        p = jax.nn.softmax(s, axis=-1)
        outs.append(p @ v)
    cat = jnp.concatenate(outs, axis=-1)
    return cat @ w_proj.T + b_proj


if __name__ == "__main__":
    # config: small shapes consistent with the module
    B, T = 2, 8                # batch, block_size (seq len)
    n_embed = 32
    num_heads = 4
    head_size = n_embed // num_heads

    key = jax.random.PRNGKey(0)
    kx, kq, kk, kv, kp, kb = jax.random.split(key, 6)

    x = jax.random.normal(kx, (B, T, n_embed), dtype=jnp.float32)

    # per-head weights, stacked, already transposed for x @ W:  (H, C, head_size)
    wq = jax.random.normal(kq, (num_heads, n_embed, head_size), dtype=jnp.float32) * 0.1
    wk = jax.random.normal(kk, (num_heads, n_embed, head_size), dtype=jnp.float32) * 0.1
    wv = jax.random.normal(kv, (num_heads, n_embed, head_size), dtype=jnp.float32) * 0.1

    # output projection (torch nn.Linear layout: weight (C, C), y = x @ W^T + b)
    w_proj = jax.random.normal(kp, (n_embed, n_embed), dtype=jnp.float32) * 0.1
    b_proj = jax.random.normal(kb, (n_embed,), dtype=jnp.float32) * 0.1

    out = multi_head_attention(x, wq, wk, wv, w_proj, b_proj,
                               num_heads=num_heads, head_size=head_size)
    out = jax.block_until_ready(out)

    ref = _reference(x, wq, wk, wv, w_proj, b_proj,
                     num_heads=num_heads, head_size=head_size)
    assert out.shape == (B, T, n_embed)
    # bf16 matmul operands + approx reciprocal -> relaxed tolerance vs f32 reference
    assert jnp.allclose(out, ref, atol=3e-2, rtol=3e-2), "mismatch vs. reference"

    print("KERNEL_OK")
</pallas_src>

<mosaic_0001>
module attributes {stable_mosaic.version = 11 : i64} {
  func.func @_mha_kernel(%arg0: i32, %arg1: memref<2x8x128xbf16, #tpu.memory_space<vmem>>, %arg2: memref<128x32xbf16, #tpu.memory_space<vmem>>, %arg3: memref<128x32xbf16, #tpu.memory_space<vmem>>, %arg4: memref<128x32xbf16, #tpu.memory_space<vmem>>, %arg5: memref<32x128xbf16, #tpu.memory_space<vmem>>, %arg6: memref<1x128xf32, #tpu.memory_space<vmem>>, %arg7: memref<2x8x128xf32, #tpu.memory_space<vmem>>) attributes {dimension_semantics = [#tpu.dimension_semantics<parallel>], iteration_bounds = array<i64: 1>, scalar_prefetch = 0 : i64, scratch_operands = 0 : i64, tpu.core_type = #tpu.core_type<tc>, window_params = [{transform_indices = @transform_0, window_bounds = array<i64: 2, 8, 128>}, {pipeline_mode = #tpu.pipeline_mode<synchronous>, transform_indices = @transform_1, window_bounds = array<i64: 128, 32>}, {pipeline_mode = #tpu.pipeline_mode<synchronous>, transform_indices = @transform_2, window_bounds = array<i64: 128, 32>}, {pipeline_mode = #tpu.pipeline_mode<synchronous>, transform_indices = @transform_3, window_bounds = array<i64: 128, 32>}, {pipeline_mode = #tpu.pipeline_mode<synchronous>, transform_indices = @transform_4, window_bounds = array<i64: 32, 128>}, {pipeline_mode = #tpu.pipeline_mode<synchronous>, transform_indices = @transform_5, window_bounds = array<i64: 1, 128>}, {transform_indices = @transform_6, window_bounds = array<i64: 2, 8, 128>}]} {
    %c0 = arith.constant 0 : index
    %c0_0 = arith.constant 0 : index
    %c0_1 = arith.constant 0 : index
    %0 = vector.load %arg1[%c0, %c0_0, %c0_1] : memref<2x8x128xbf16, #tpu.memory_space<vmem>>, vector<2x8x128xbf16>
    %1 = vector.shape_cast %0 : vector<2x8x128xbf16> to vector<16x128xbf16>
    %c0_2 = arith.constant 0 : index
    %c0_3 = arith.constant 0 : index
    %2 = vector.load %arg2[%c0_2, %c0_3] : memref<128x32xbf16, #tpu.memory_space<vmem>>, vector<128x32xbf16>
    %cst = arith.constant dense<0.000000e+00> : vector<16x32xf32>
    %3 = tpu.matmul %1, %2, %cst {dimension_numbers = #tpu.dot_dimension_numbers<[1], [0], [0], [1], [0, 0, 1, 1], [], []>} : vector<16x128xbf16>, vector<128x32xbf16>, vector<16x32xf32> -> vector<16x32xf32>
    %c0_4 = arith.constant 0 : index
    %c0_5 = arith.constant 0 : index
    %4 = vector.load %arg3[%c0_4, %c0_5] : memref<128x32xbf16, #tpu.memory_space<vmem>>, vector<128x32xbf16>
    %cst_6 = arith.constant dense<0.000000e+00> : vector<16x32xf32>
    %5 = tpu.matmul %1, %4, %cst_6 {dimension_numbers = #tpu.dot_dimension_numbers<[1], [0], [0], [1], [0, 0, 1, 1], [], []>} : vector<16x128xbf16>, vector<128x32xbf16>, vector<16x32xf32> -> vector<16x32xf32>
    %c0_7 = arith.constant 0 : index
    %c0_8 = arith.constant 0 : index
    %6 = vector.load %arg4[%c0_7, %c0_8] : memref<128x32xbf16, #tpu.memory_space<vmem>>, vector<128x32xbf16>
    %cst_9 = arith.constant dense<0.000000e+00> : vector<16x32xf32>
    %7 = tpu.matmul %1, %6, %cst_9 {dimension_numbers = #tpu.dot_dimension_numbers<[1], [0], [0], [1], [0, 0, 1, 1], [], []>} : vector<16x128xbf16>, vector<128x32xbf16>, vector<16x32xf32> -> vector<16x32xf32>
    %8 = tpu.iota {dimensions = array<i32: 0>} : vector<8x8xi32>
    %9 = tpu.iota {dimensions = array<i32: 1>} : vector<8x8xi32>
    %10 = arith.cmpi sle, %9, %8 : vector<8x8xi32>
    %cst_10 = arith.constant 0.000000e+00 : f32
    %cst_11 = arith.constant -1.000000e+30 : f32
    %11 = vector.broadcast %cst_10 : f32 to vector<8x8xf32>
    %12 = vector.broadcast %cst_11 : f32 to vector<8x8xf32>
    %13 = arith.select %10, %11, %12 : vector<8x8xi1>, vector<8x8xf32>
    %14 = vector.extract_strided_slice %3 {offsets = [0, 0], sizes = [8, 32], strides = [1, 1]} : vector<16x32xf32> to vector<8x32xf32>
    %15 = vector.extract_strided_slice %5 {offsets = [0, 0], sizes = [8, 32], strides = [1, 1]} : vector<16x32xf32> to vector<8x32xf32>
    %16 = vector.extract_strided_slice %7 {offsets = [0, 0], sizes = [8, 32], strides = [1, 1]} : vector<16x32xf32> to vector<8x32xf32>
    %17 = vector.extract_strided_slice %14 {offsets = [0, 0], sizes = [8, 8], strides = [1, 1]} : vector<8x32xf32> to vector<8x8xf32>
    %18 = vector.extract_strided_slice %15 {offsets = [0, 0], sizes = [8, 8], strides = [1, 1]} : vector<8x32xf32> to vector<8x8xf32>
    %19 = vector.extract_strided_slice %16 {offsets = [0, 0], sizes = [8, 8], strides = [1, 1]} : vector<8x32xf32> to vector<8x8xf32>
    %20 = tpu.transpose %18, [1, 0] : vector<8x8xf32> -> vector<8x8xf32>
    %cst_12 = arith.constant dense<0.000000e+00> : vector<8x8xf32>
    %21 = tpu.matmul %17, %20, %cst_12 {dimension_numbers = #tpu.dot_dimension_numbers<[1], [0], [0], [1], [0, 0, 1, 1], [], []>} : vector<8x8xf32>, vector<8x8xf32>, vector<8x8xf32> -> vector<8x8xf32>
    %22 = arith.addf %21, %13 : vector<8x8xf32>
    %cst_13 = arith.constant dense<0xFF800000> : vector<8xf32>
    %23 = vector.multi_reduction <maximumf>, %22, %cst_13 [1] : vector<8x8xf32> to vector<8xf32>
    %24 = vector.shape_cast %23 : vector<8xf32> to vector<8x1xf32>
    %25 = vector.broadcast %24 : vector<8x1xf32> to vector<8x8xf32>
    %26 = arith.subf %22, %25 : vector<8x8xf32>
    %27 = math.exp %26 : vector<8x8xf32>
    %cst_14 = arith.constant dense<0.000000e+00> : vector<8xf32>
    %28 = vector.multi_reduction <add>, %27, %cst_14 [1] : vector<8x8xf32> to vector<8xf32>
    %29 = vector.shape_cast %28 : vector<8xf32> to vector<8x1xf32>
    %30 = tpu.reciprocal %29 {approx = true} : vector<8x1xf32> -> vector<8x1xf32>
    %31 = vector.broadcast %30 : vector<8x1xf32> to vector<8x8xf32>
    %32 = arith.mulf %27, %31 : vector<8x8xf32>
    %cst_15 = arith.constant dense<0.000000e+00> : vector<8x8xf32>
    %33 = tpu.matmul %32, %19, %cst_15 {dimension_numbers = #tpu.dot_dimension_numbers<[1], [0], [0], [1], [0, 0, 1, 1], [], []>} : vector<8x8xf32>, vector<8x8xf32>, vector<8x8xf32> -> vector<8x8xf32>
    %34 = vector.extract_strided_slice %14 {offsets = [0, 8], sizes = [8, 8], strides = [1, 1]} : vector<8x32xf32> to vector<8x8xf32>
    %35 = vector.extract_strided_slice %15 {offsets = [0, 8], sizes = [8, 8], strides = [1, 1]} : vector<8x32xf32> to vector<8x8xf32>
    %36 = vector.extract_strided_slice %16 {offsets = [0, 8], sizes = [8, 8], strides = [1, 1]} : vector<8x32xf32> to vector<8x8xf32>
    %37 = tpu.transpose %35, [1, 0] : vector<8x8xf32> -> vector<8x8xf32>
    %cst_16 = arith.constant dense<0.000000e+00> : vector<8x8xf32>
    %38 = tpu.matmul %34, %37, %cst_16 {dimension_numbers = #tpu.dot_dimension_numbers<[1], [0], [0], [1], [0, 0, 1, 1], [], []>} : vector<8x8xf32>, vector<8x8xf32>, vector<8x8xf32> -> vector<8x8xf32>
    %39 = arith.addf %38, %13 : vector<8x8xf32>
    %cst_17 = arith.constant dense<0xFF800000> : vector<8xf32>
    %40 = vector.multi_reduction <maximumf>, %39, %cst_17 [1] : vector<8x8xf32> to vector<8xf32>
    %41 = vector.shape_cast %40 : vector<8xf32> to vector<8x1xf32>
    %42 = vector.broadcast %41 : vector<8x1xf32> to vector<8x8xf32>
    %43 = arith.subf %39, %42 : vector<8x8xf32>
    %44 = math.exp %43 : vector<8x8xf32>
    %cst_18 = arith.constant dense<0.000000e+00> : vector<8xf32>
    %45 = vector.multi_reduction <add>, %44, %cst_18 [1] : vector<8x8xf32> to vector<8xf32>
    %46 = vector.shape_cast %45 : vector<8xf32> to vector<8x1xf32>
    %47 = tpu.reciprocal %46 {approx = true} : vector<8x1xf32> -> vector<8x1xf32>
    %48 = vector.broadcast %47 : vector<8x1xf32> to vector<8x8xf32>
    %49 = arith.mulf %44, %48 : vector<8x8xf32>
    %cst_19 = arith.constant dense<0.000000e+00> : vector<8x8xf32>
    %50 = tpu.matmul %49, %36, %cst_19 {dimension_numbers = #tpu.dot_dimension_numbers<[1], [0], [0], [1], [0, 0, 1, 1], [], []>} : vector<8x8xf32>, vector<8x8xf32>, vector<8x8xf32> -> vector<8x8xf32>
    %51 = vector.extract_strided_slice %14 {offsets = [0, 16], sizes = [8, 8], strides = [1, 1]} : vector<8x32xf32> to vector<8x8xf32>
    %52 = vector.extract_strided_slice %15 {offsets = [0, 16], sizes = [8, 8], strides = [1, 1]} : vector<8x32xf32> to vector<8x8xf32>
    %53 = vector.extract_strided_slice %16 {offsets = [0, 16], sizes = [8, 8], strides = [1, 1]} : vector<8x32xf32> to vector<8x8xf32>
    %54 = tpu.transpose %52, [1, 0] : vector<8x8xf32> -> vector<8x8xf32>
    %cst_20 = arith.constant dense<0.000000e+00> : vector<8x8xf32>
    %55 = tpu.matmul %51, %54, %cst_20 {dimension_numbers = #tpu.dot_dimension_numbers<[1], [0], [0], [1], [0, 0, 1, 1], [], []>} : vector<8x8xf32>, vector<8x8xf32>, vector<8x8xf32> -> vector<8x8xf32>
    %56 = arith.addf %55, %13 : vector<8x8xf32>
    %cst_21 = arith.constant dense<0xFF800000> : vector<8xf32>
    %57 = vector.multi_reduction <maximumf>, %56, %cst_21 [1] : vector<8x8xf32> to vector<8xf32>
    %58 = vector.shape_cast %57 : vector<8xf32> to vector<8x1xf32>
    %59 = vector.broadcast %58 : vector<8x1xf32> to vector<8x8xf32>
    %60 = arith.subf %56, %59 : vector<8x8xf32>
    %61 = math.exp %60 : vector<8x8xf32>
    %cst_22 = arith.constant dense<0.000000e+00> : vector<8xf32>
    %62 = vector.multi_reduction <add>, %61, %cst_22 [1] : vector<8x8xf32> to vector<8xf32>
    %63 = vector.shape_cast %62 : vector<8xf32> to vector<8x1xf32>
    %64 = tpu.reciprocal %63 {approx = true} : vector<8x1xf32> -> vector<8x1xf32>
    %65 = vector.broadcast %64 : vector<8x1xf32> to vector<8x8xf32>
    %66 = arith.mulf %61, %65 : vector<8x8xf32>
    %cst_23 = arith.constant dense<0.000000e+00> : vector<8x8xf32>
    %67 = tpu.matmul %66, %53, %cst_23 {dimension_numbers = #tpu.dot_dimension_numbers<[1], [0], [0], [1], [0, 0, 1, 1], [], []>} : vector<8x8xf32>, vector<8x8xf32>, vector<8x8xf32> -> vector<8x8xf32>
    %68 = vector.extract_strided_slice %14 {offsets = [0, 24], sizes = [8, 8], strides = [1, 1]} : vector<8x32xf32> to vector<8x8xf32>
    %69 = vector.extract_strided_slice %15 {offsets = [0, 24], sizes = [8, 8], strides = [1, 1]} : vector<8x32xf32> to vector<8x8xf32>
    %70 = vector.extract_strided_slice %16 {offsets = [0, 24], sizes = [8, 8], strides = [1, 1]} : vector<8x32xf32> to vector<8x8xf32>
    %71 = tpu.transpose %69, [1, 0] : vector<8x8xf32> -> vector<8x8xf32>
    %cst_24 = arith.constant dense<0.000000e+00> : vector<8x8xf32>
    %72 = tpu.matmul %68, %71, %cst_24 {dimension_numbers = #tpu.dot_dimension_numbers<[1], [0], [0], [1], [0, 0, 1, 1], [], []>} : vector<8x8xf32>, vector<8x8xf32>, vector<8x8xf32> -> vector<8x8xf32>
    %73 = arith.addf %72, %13 : vector<8x8xf32>
    %cst_25 = arith.constant dense<0xFF800000> : vector<8xf32>
    %74 = vector.multi_reduction <maximumf>, %73, %cst_25 [1] : vector<8x8xf32> to vector<8xf32>
    %75 = vector.shape_cast %74 : vector<8xf32> to vector<8x1xf32>
    %76 = vector.broadcast %75 : vector<8x1xf32> to vector<8x8xf32>
    %77 = arith.subf %73, %76 : vector<8x8xf32>
    %78 = math.exp %77 : vector<8x8xf32>
    %cst_26 = arith.constant dense<0.000000e+00> : vector<8xf32>
    %79 = vector.multi_reduction <add>, %78, %cst_26 [1] : vector<8x8xf32> to vector<8xf32>
    %80 = vector.shape_cast %79 : vector<8xf32> to vector<8x1xf32>
    %81 = tpu.reciprocal %80 {approx = true} : vector<8x1xf32> -> vector<8x1xf32>
    %82 = vector.broadcast %81 : vector<8x1xf32> to vector<8x8xf32>
    %83 = arith.mulf %78, %82 : vector<8x8xf32>
    %cst_27 = arith.constant dense<0.000000e+00> : vector<8x8xf32>
    %84 = tpu.matmul %83, %70, %cst_27 {dimension_numbers = #tpu.dot_dimension_numbers<[1], [0], [0], [1], [0, 0, 1, 1], [], []>} : vector<8x8xf32>, vector<8x8xf32>, vector<8x8xf32> -> vector<8x8xf32>
    %85 = tpu.concatenate %33, %50, %67, %84 in 1 : vector<8x8xf32>, vector<8x8xf32>, vector<8x8xf32>, vector<8x8xf32> -> vector<8x32xf32>
    %86 = vector.extract_strided_slice %3 {offsets = [8, 0], sizes = [8, 32], strides = [1, 1]} : vector<16x32xf32> to vector<8x32xf32>
    %87 = vector.extract_strided_slice %5 {offsets = [8, 0], sizes = [8, 32], strides = [1, 1]} : vector<16x32xf32> to vector<8x32xf32>
    %88 = vector.extract_strided_slice %7 {offsets = [8, 0], sizes = [8, 32], strides = [1, 1]} : vector<16x32xf32> to vector<8x32xf32>
    %89 = vector.extract_strided_slice %86 {offsets = [0, 0], sizes = [8, 8], strides = [1, 1]} : vector<8x32xf32> to vector<8x8xf32>
    %90 = vector.extract_strided_slice %87 {offsets = [0, 0], sizes = [8, 8], strides = [1, 1]} : vector<8x32xf32> to vector<8x8xf32>
    %91 = vector.extract_strided_slice %88 {offsets = [0, 0], sizes = [8, 8], strides = [1, 1]} : vector<8x32xf32> to vector<8x8xf32>
    %92 = tpu.transpose %90, [1, 0] : vector<8x8xf32> -> vector<8x8xf32>
    %cst_28 = arith.constant dense<0.000000e+00> : vector<8x8xf32>
    %93 = tpu.matmul %89, %92, %cst_28 {dimension_numbers = #tpu.dot_dimension_numbers<[1], [0], [0], [1], [0, 0, 1, 1], [], []>} : vector<8x8xf32>, vector<8x8xf32>, vector<8x8xf32> -> vector<8x8xf32>
    %94 = arith.addf %93, %13 : vector<8x8xf32>
    %cst_29 = arith.constant dense<0xFF800000> : vector<8xf32>
    %95 = vector.multi_reduction <maximumf>, %94, %cst_29 [1] : vector<8x8xf32> to vector<8xf32>
    %96 = vector.shape_cast %95 : vector<8xf32> to vector<8x1xf32>
    %97 = vector.broadcast %96 : vector<8x1xf32> to vector<8x8xf32>
    %98 = arith.subf %94, %97 : vector<8x8xf32>
    %99 = math.exp %98 : vector<8x8xf32>
    %cst_30 = arith.constant dense<0.000000e+00> : vector<8xf32>
    %100 = vector.multi_reduction <add>, %99, %cst_30 [1] : vector<8x8xf32> to vector<8xf32>
    %101 = vector.shape_cast %100 : vector<8xf32> to vector<8x1xf32>
    %102 = tpu.reciprocal %101 {approx = true} : vector<8x1xf32> -> vector<8x1xf32>
    %103 = vector.broadcast %102 : vector<8x1xf32> to vector<8x8xf32>
    %104 = arith.mulf %99, %103 : vector<8x8xf32>
    %cst_31 = arith.constant dense<0.000000e+00> : vector<8x8xf32>
    %105 = tpu.matmul %104, %91, %cst_31 {dimension_numbers = #tpu.dot_dimension_numbers<[1], [0], [0], [1], [0, 0, 1, 1], [], []>} : vector<8x8xf32>, vector<8x8xf32>, vector<8x8xf32> -> vector<8x8xf32>
    %106 = vector.extract_strided_slice %86 {offsets = [0, 8], sizes = [8, 8], strides = [1, 1]} : vector<8x32xf32> to vector<8x8xf32>
    %107 = vector.extract_strided_slice %87 {offsets = [0, 8], sizes = [8, 8], strides = [1, 1]} : vector<8x32xf32> to vector<8x8xf32>
    %108 = vector.extract_strided_slice %88 {offsets = [0, 8], sizes = [8, 8], strides = [1, 1]} : vector<8x32xf32> to vector<8x8xf32>
    %109 = tpu.transpose %107, [1, 0] : vector<8x8xf32> -> vector<8x8xf32>
    %cst_32 = arith.constant dense<0.000000e+00> : vector<8x8xf32>
    %110 = tpu.matmul %106, %109, %cst_32 {dimension_numbers = #tpu.dot_dimension_numbers<[1], [0], [0], [1], [0, 0, 1, 1], [], []>} : vector<8x8xf32>, vector<8x8xf32>, vector<8x8xf32> -> vector<8x8xf32>
    %111 = arith.addf %110, %13 : vector<8x8xf32>
    %cst_33 = arith.constant dense<0xFF800000> : vector<8xf32>
    %112 = vector.multi_reduction <maximumf>, %111, %cst_33 [1] : vector<8x8xf32> to vector<8xf32>
    %113 = vector.shape_cast %112 : vector<8xf32> to vector<8x1xf32>
    %114 = vector.broadcast %113 : vector<8x1xf32> to vector<8x8xf32>
    %115 = arith.subf %111, %114 : vector<8x8xf32>
    %116 = math.exp %115 : vector<8x8xf32>
    %cst_34 = arith.constant dense<0.000000e+00> : vector<8xf32>
    %117 = vector.multi_reduction <add>, %116, %cst_34 [1] : vector<8x8xf32> to vector<8xf32>
    %118 = vector.shape_cast %117 : vector<8xf32> to vector<8x1xf32>
    %119 = tpu.reciprocal %118 {approx = true} : vector<8x1xf32> -> vector<8x1xf32>
    %120 = vector.broadcast %119 : vector<8x1xf32> to vector<8x8xf32>
    %121 = arith.mulf %116, %120 : vector<8x8xf32>
    %cst_35 = arith.constant dense<0.000000e+00> : vector<8x8xf32>
    %122 = tpu.matmul %121, %108, %cst_35 {dimension_numbers = #tpu.dot_dimension_numbers<[1], [0], [0], [1], [0, 0, 1, 1], [], []>} : vector<8x8xf32>, vector<8x8xf32>, vector<8x8xf32> -> vector<8x8xf32>
    %123 = vector.extract_strided_slice %86 {offsets = [0, 16], sizes = [8, 8], strides = [1, 1]} : vector<8x32xf32> to vector<8x8xf32>
    %124 = vector.extract_strided_slice %87 {offsets = [0, 16], sizes = [8, 8], strides = [1, 1]} : vector<8x32xf32> to vector<8x8xf32>
    %125 = vector.extract_strided_slice %88 {offsets = [0, 16], sizes = [8, 8], strides = [1, 1]} : vector<8x32xf32> to vector<8x8xf32>
    %126 = tpu.transpose %124, [1, 0] : vector<8x8xf32> -> vector<8x8xf32>
    %cst_36 = arith.constant dense<0.000000e+00> : vector<8x8xf32>
    %127 = tpu.matmul %123, %126, %cst_36 {dimension_numbers = #tpu.dot_dimension_numbers<[1], [0], [0], [1], [0, 0, 1, 1], [], []>} : vector<8x8xf32>, vector<8x8xf32>, vector<8x8xf32> -> vector<8x8xf32>
    %128 = arith.addf %127, %13 : vector<8x8xf32>
    %cst_37 = arith.constant dense<0xFF800000> : vector<8xf32>
    %129 = vector.multi_reduction <maximumf>, %128, %cst_37 [1] : vector<8x8xf32> to vector<8xf32>
    %130 = vector.shape_cast %129 : vector<8xf32> to vector<8x1xf32>
    %131 = vector.broadcast %130 : vector<8x1xf32> to vector<8x8xf32>
    %132 = arith.subf %128, %131 : vector<8x8xf32>
    %133 = math.exp %132 : vector<8x8xf32>
    %cst_38 = arith.constant dense<0.000000e+00> : vector<8xf32>
    %134 = vector.multi_reduction <add>, %133, %cst_38 [1] : vector<8x8xf32> to vector<8xf32>
    %135 = vector.shape_cast %134 : vector<8xf32> to vector<8x1xf32>
    %136 = tpu.reciprocal %135 {approx = true} : vector<8x1xf32> -> vector<8x1xf32>
    %137 = vector.broadcast %136 : vector<8x1xf32> to vector<8x8xf32>
    %138 = arith.mulf %133, %137 : vector<8x8xf32>
    %cst_39 = arith.constant dense<0.000000e+00> : vector<8x8xf32>
    %139 = tpu.matmul %138, %125, %cst_39 {dimension_numbers = #tpu.dot_dimension_numbers<[1], [0], [0], [1], [0, 0, 1, 1], [], []>} : vector<8x8xf32>, vector<8x8xf32>, vector<8x8xf32> -> vector<8x8xf32>
    %140 = vector.extract_strided_slice %86 {offsets = [0, 24], sizes = [8, 8], strides = [1, 1]} : vector<8x32xf32> to vector<8x8xf32>
    %141 = vector.extract_strided_slice %87 {offsets = [0, 24], sizes = [8, 8], strides = [1, 1]} : vector<8x32xf32> to vector<8x8xf32>
    %142 = vector.extract_strided_slice %88 {offsets = [0, 24], sizes = [8, 8], strides = [1, 1]} : vector<8x32xf32> to vector<8x8xf32>
    %143 = tpu.transpose %141, [1, 0] : vector<8x8xf32> -> vector<8x8xf32>
    %cst_40 = arith.constant dense<0.000000e+00> : vector<8x8xf32>
    %144 = tpu.matmul %140, %143, %cst_40 {dimension_numbers = #tpu.dot_dimension_numbers<[1], [0], [0], [1], [0, 0, 1, 1], [], []>} : vector<8x8xf32>, vector<8x8xf32>, vector<8x8xf32> -> vector<8x8xf32>
    %145 = arith.addf %144, %13 : vector<8x8xf32>
    %cst_41 = arith.constant dense<0xFF800000> : vector<8xf32>
    %146 = vector.multi_reduction <maximumf>, %145, %cst_41 [1] : vector<8x8xf32> to vector<8xf32>
    %147 = vector.shape_cast %146 : vector<8xf32> to vector<8x1xf32>
    %148 = vector.broadcast %147 : vector<8x1xf32> to vector<8x8xf32>
    %149 = arith.subf %145, %148 : vector<8x8xf32>
    %150 = math.exp %149 : vector<8x8xf32>
    %cst_42 = arith.constant dense<0.000000e+00> : vector<8xf32>
    %151 = vector.multi_reduction <add>, %150, %cst_42 [1] : vector<8x8xf32> to vector<8xf32>
    %152 = vector.shape_cast %151 : vector<8xf32> to vector<8x1xf32>
    %153 = tpu.reciprocal %152 {approx = true} : vector<8x1xf32> -> vector<8x1xf32>
    %154 = vector.broadcast %153 : vector<8x1xf32> to vector<8x8xf32>
    %155 = arith.mulf %150, %154 : vector<8x8xf32>
    %cst_43 = arith.constant dense<0.000000e+00> : vector<8x8xf32>
    %156 = tpu.matmul %155, %142, %cst_43 {dimension_numbers = #tpu.dot_dimension_numbers<[1], [0], [0], [1], [0, 0, 1, 1], [], []>} : vector<8x8xf32>, vector<8x8xf32>, vector<8x8xf32> -> vector<8x8xf32>
    %157 = tpu.concatenate %105, %122, %139, %156 in 1 : vector<8x8xf32>, vector<8x8xf32>, vector<8x8xf32>, vector<8x8xf32> -> vector<8x32xf32>
    %158 = tpu.concatenate %85, %157 in 0 : vector<8x32xf32>, vector<8x32xf32> -> vector<16x32xf32>
    %159 = arith.truncf %158 : vector<16x32xf32> to vector<16x32xbf16>
    %c0_44 = arith.constant 0 : index
    %c0_45 = arith.constant 0 : index
    %160 = vector.load %arg5[%c0_44, %c0_45] : memref<32x128xbf16, #tpu.memory_space<vmem>>, vector<32x128xbf16>
    %cst_46 = arith.constant dense<0.000000e+00> : vector<16x128xf32>
    %161 = tpu.matmul %159, %160, %cst_46 {dimension_numbers = #tpu.dot_dimension_numbers<[1], [0], [0], [1], [0, 0, 1, 1], [], []>} : vector<16x32xbf16>, vector<32x128xbf16>, vector<16x128xf32> -> vector<16x128xf32>
    %c0_47 = arith.constant 0 : index
    %c0_48 = arith.constant 0 : index
    %162 = vector.load %arg6[%c0_47, %c0_48] : memref<1x128xf32, #tpu.memory_space<vmem>>, vector<1x128xf32>
    %163 = vector.broadcast %162 : vector<1x128xf32> to vector<16x128xf32>
    %164 = arith.addf %161, %163 : vector<16x128xf32>
    %165 = vector.shape_cast %164 : vector<16x128xf32> to vector<2x8x128xf32>
    %c0_49 = arith.constant 0 : index
    %c0_50 = arith.constant 0 : index
    %c0_51 = arith.constant 0 : index
    %166 = vector.load %arg7[%c0_49, %c0_50, %c0_51] : memref<2x8x128xf32, #tpu.memory_space<vmem>>, vector<2x8x128xf32>
    tpu.vector_store %arg7[%c0_49, %c0_50, %c0_51], %165 {strides = array<i32>} : memref<2x8x128xf32, #tpu.memory_space<vmem>>, vector<2x8x128xf32>,
    return
  }
  func.func @transform_0(%arg0: i32) -> (i32, i32, i32) {
    %c0_i32 = arith.constant 0 : i32
    %c0_i32_0 = arith.constant 0 : i32
    %c0_i32_1 = arith.constant 0 : i32
    return %arg0, %c0_i32, %c0_i32_0 : i32, i32, i32
  }
  func.func @transform_1(%arg0: i32) -> (i32, i32) {
    %c0_i32 = arith.constant 0 : i32
    %c0_i32_0 = arith.constant 0 : i32
    %c0_i32_1 = arith.constant 0 : i32
    return %c0_i32, %c0_i32_0 : i32, i32
  }
  func.func @transform_2(%arg0: i32) -> (i32, i32) {
    %c0_i32 = arith.constant 0 : i32
    %c0_i32_0 = arith.constant 0 : i32
    %c0_i32_1 = arith.constant 0 : i32
    return %c0_i32, %c0_i32_0 : i32, i32
  }
  func.func @transform_3(%arg0: i32) -> (i32, i32) {
    %c0_i32 = arith.constant 0 : i32
    %c0_i32_0 = arith.constant 0 : i32
    %c0_i32_1 = arith.constant 0 : i32
    return %c0_i32, %c0_i32_0 : i32, i32
  }
  func.func @transform_4(%arg0: i32) -> (i32, i32) {
    %c0_i32 = arith.constant 0 : i32
    %c0_i32_0 = arith.constant 0 : i32
    %c0_i32_1 = arith.constant 0 : i32
    return %c0_i32, %c0_i32_0 : i32, i32
  }
  func.func @transform_5(%arg0: i32) -> (i32, i32) {
    %c0_i32 = arith.constant 0 : i32
    %c0_i32_0 = arith.constant 0 : i32
    %c0_i32_1 = arith.constant 0 : i32
    return %c0_i32, %c0_i32_0 : i32, i32
  }
  func.func @transform_6(%arg0: i32) -> (i32, i32, i32) {
    %c0_i32 = arith.constant 0 : i32
    %c0_i32_0 = arith.constant 0 : i32
    %c0_i32_1 = arith.constant 0 : i32
    return %arg0, %c0_i32, %c0_i32_0 : i32, i32, i32
  }
}

</mosaic_0001>

<llo_original>
// kernel: tpu_custom_call.1
$region0: #{tpu_custom_call.1}
  #allocation0 [shape = 'u32[]', space=smem, size = 0x4, offset = 0x4, fixed_abs, tag = 'smem constant byte address 0x4 - core index']
  #allocation1 [shape = 'u32[144,128]{1,0:T(1,128)}', space=vmem, size = 0x12000, scoped, tag = 'internal scratch']
  %s0 = inlined_call_operand.vmem [shape: bf16[2,8,128], index: 0, kind: input, shape index: {}]
  %s1 = inlined_call_operand.vmem [shape: bf16[128,32], index: 1, kind: input, shape index: {}]
  %s2 = inlined_call_operand.vmem [shape: bf16[128,32], index: 2, kind: input, shape index: {}]
  %s3 = inlined_call_operand.vmem [shape: bf16[128,32], index: 3, kind: input, shape index: {}]
  %s4 = inlined_call_operand.vmem [shape: bf16[32,128], index: 4, kind: input, shape index: {}]
  %s5 = inlined_call_operand.vmem [shape: f32[1,128], index: 5, kind: input, shape index: {}]
  %s6 = inlined_call_operand.hbm [shape: f32[2,8,128], index: 6, kind: output, shape index: {}]
  %s7 = sld [smem:[#allocation0]]
  $region34: #{tpu_custom_call.1} parent=0
    _
  %s9 = ssub.s32 1, %s7
  %s10 = scalar_select 0, %s9, %s7
  $region1: #{tpu_custom_call.1} parent=0
    #allocation2 [shape = 'u8[8192]{0}', space=vmem, size = 0x2000, scoped, tag = 'output window, operand 0, single buffered']
    #allocation3 [shape = 's32[1]{0}', space=sflag, size = 0x4, scoped, tag = 'scoped memory for tpu_custom_call.1']
    %11 = vsyncpa [#allocation3], 0
    // Predicated region
    $region2: #{tpu_custom_call.1} parent=1 // pred_check
      _
    $region3: #{tpu_custom_call.1} parent=1 // pred_check_branch
      %13 = sbr.rel (0) target = $region5
    $region4: #{tpu_custom_call.1} parent=1 // pred_region
      _
    $region5: #{tpu_custom_call.1} parent=1 // pred_fallthru
      _
    // Predicated region
    $region6: #{tpu_custom_call.1} parent=1 // pred_check
      _
    $region7: #{tpu_custom_call.1} parent=1 // pred_check_branch
      %15 = sbr.rel (0) target = $region9
    $region8: #{tpu_custom_call.1} parent=1 // pred_region
      _
    $region9: #{tpu_custom_call.1} parent=1 // pred_fallthru
      _
    // Predicated region
    $region10: #{tpu_custom_call.1} parent=1 // pred_check
      _
    $region11: #{tpu_custom_call.1} parent=1 // pred_check_branch
      %17 = sbr.rel (0) target = $region13
    $region12: #{tpu_custom_call.1} parent=1 // pred_region
      _
    $region13: #{tpu_custom_call.1} parent=1 // pred_fallthru
      _
    // Predicated region
    $region14: #{tpu_custom_call.1} parent=1 // pred_check
      _
    $region15: #{tpu_custom_call.1} parent=1 // pred_check_branch
      %19 = sbr.rel (0) target = $region17
    $region16: #{tpu_custom_call.1} parent=1 // pred_region
      _
    $region17: #{tpu_custom_call.1} parent=1 // pred_fallthru
      _
    // Predicated region
    $region18: #{tpu_custom_call.1} parent=1 // pred_check
      _
    $region19: #{tpu_custom_call.1} parent=1 // pred_check_branch
      %21 = sbr.rel (0) target = $region21
    $region20: #{tpu_custom_call.1} parent=1 // pred_region
      _
    $region21: #{tpu_custom_call.1} parent=1 // pred_fallthru
      _
    // Predicated region
    $region22: #{tpu_custom_call.1} parent=1 // pred_check
      _
    $region23: #{tpu_custom_call.1} parent=1 // pred_check_branch
      %23 = sbr.rel (0) target = $region25
    $region24: #{tpu_custom_call.1} parent=1 // pred_region
      _
    $region25: #{tpu_custom_call.1} parent=1 // pred_fallthru
      _
    %v25 = vld [vmem:[%s0] sm:$0xf]
    %v26 = vld [vmem:[%s0 + $0x4] sm:$0xf]
    %v27 = vld [vmem:[%s1] sm:$0xf]
    %v28 = vld [vmem:[%s1 + $0x4] sm:$0xf]
    %v29 = vld [vmem:[%s1 + $0x8] sm:$0xf]
    %v30 = vld [vmem:[%s1 + $0xc] sm:$0xf]
    %v31 = vld [vmem:[%s1 + $0x10] sm:$0xf]
    %v32 = vld [vmem:[%s1 + $0x14] sm:$0xf]
    %v33 = vld [vmem:[%s1 + $0x18] sm:$0xf]
    %v34 = vld [vmem:[%s1 + $0x1c] sm:$0xf]
    %v35 = vld [vmem:[%s1 + $0x20] sm:$0xf]
    %v36 = vld [vmem:[%s1 + $0x24] sm:$0xf]
    %v37 = vld [vmem:[%s1 + $0x28] sm:$0xf]
    %v38 = vld [vmem:[%s1 + $0x2c] sm:$0xf]
    %v39 = vld [vmem:[%s1 + $0x30] sm:$0xf]
    %v40 = vld [vmem:[%s1 + $0x34] sm:$0xf]
    %v41 = vld [vmem:[%s1 + $0x38] sm:$0xf]
    %v42 = vld [vmem:[%s1 + $0x3c] sm:$0xf]
    %v45 = vunpack.c.l.b16 %v25
    %v46 = vunpack.c.l.b16 %v26
    %v47 = vpack.c.b16 %v46, %v45
    %v65 = vunpack.c.l.b16 %v27
    %v66 = vunpack.c.l.b16 %v28
    %v67 = vunpack.c.l.b16 %v29
    %v68 = vunpack.c.l.b16 %v30
    %v69 = vunpack.c.l.b16 %v31
    %v70 = vunpack.c.l.b16 %v32
    %v71 = vunpack.c.l.b16 %v33
    %v72 = vunpack.c.l.b16 %v34
    %v73 = vunpack.c.l.b16 %v35
    %v74 = vunpack.c.l.b16 %v36
    %v75 = vunpack.c.l.b16 %v37
    %v76 = vunpack.c.l.b16 %v38
    %v77 = vunpack.c.l.b16 %v39
    %v78 = vunpack.c.l.b16 %v40
    %v79 = vunpack.c.l.b16 %v41
    %v80 = vunpack.c.l.b16 %v42
    %v81 = vpack.c.b16 %v66, %v65
    %v82 = vpack.c.b16 %v68, %v67
    %v83 = vpack.c.b16 %v70, %v69
    %v84 = vpack.c.b16 %v72, %v71
    %v85 = vpack.c.b16 %v74, %v73
    %v86 = vpack.c.b16 %v76, %v75
    %v87 = vpack.c.b16 %v78, %v77
    %v88 = vpack.c.b16 %v80, %v79
    %97 = vmatprep.subr.bf16.mxu0 0
    %98 = vmatpush1.bf16.msra.mxu0 %v81
    %99 = vmatprep.subr.bf16.mxu0 0
    %100 = vmatpush1.bf16.msra.mxu0 %v82
    %101 = vmatprep.subr.bf16.mxu0 0
    %102 = vmatpush1.bf16.msra.mxu0 %v83
    %103 = vmatprep.subr.bf16.mxu0 0
    %104 = vmatpush1.bf16.msra.mxu0 %v84
    %105 = vmatprep.subr.bf16.mxu0 0
    %106 = vmatpush1.bf16.msra.mxu0 %v85
    %107 = vmatprep.subr.bf16.mxu0 0
    %108 = vmatpush1.bf16.msra.mxu0 %v86
    %109 = vmatprep.subr.bf16.mxu0 0
    %110 = vmatpush1.bf16.msra.mxu0 %v87
    %111 = vmatprep.subr.bf16.mxu0 0
    %112 = vmatpush1.bf16.msra.mxu0 %v88
    %113 = vmatprep.subr.bf16.mxu0 0
    %114 = vmatpush1.bf16.msra.mxu0 0
    %115 = vmatprep.subr.bf16.mxu0 0
    %116 = vmatpush1.bf16.msra.mxu0 0
    %117 = vmatprep.subr.bf16.mxu0 0
    %118 = vmatpush1.bf16.msra.mxu0 0
    %119 = vmatprep.subr.bf16.mxu0 0
    %120 = vmatpush1.bf16.msra.mxu0 0
    %121 = vmatprep.subr.bf16.mxu0 0
    %122 = vmatpush1.bf16.msra.mxu0 0
    %123 = vmatprep.subr.bf16.mxu0 0
    %124 = vmatpush1.bf16.msra.mxu0 0
    %125 = vmatprep.subr.bf16.mxu0 0
    %126 = vmatpush1.bf16.msra.mxu0 0
    %127 = vmatprep.subr.bf16.mxu0 0
    %128 = vmatpush1.bf16.msra.mxu0 0
    %129 = vmatprep.mubr.bf16.mxu0 0
    %130 = vmatmul.mubr.bf16.gmra.mrb[0].mxu0 %v47
    %v131 = vpop.f32.mrb[0].mxu0
    %v132 = vadd.f32 0.0, %v131
    %v133 = vpop.f32.mrb[0].mxu0
    %v134 = vpop.f32.mrb[0].mxu0
    %v135 = vadd.f32 0.0, %v134
    %v136 = vpop.f32.mrb[0].mxu0
    %137 = vdwg.mxu0
    %v138 = vld [vmem:[%s2] sm:$0xf]
    %v139 = vld [vmem:[%s2 + $0x4] sm:$0xf]
    %v140 = vld [vmem:[%s2 + $0x8] sm:$0xf]
    %v141 = vld [vmem:[%s2 + $0xc] sm:$0xf]
    %v142 = vld [vmem:[%s2 + $0x10] sm:$0xf]
    %v143 = vld [vmem:[%s2 + $0x14] sm:$0xf]
    %v144 = vld [vmem:[%s2 + $0x18] sm:$0xf]
    %v145 = vld [vmem:[%s2 + $0x1c] sm:$0xf]
    %v146 = vld [vmem:[%s2 + $0x20] sm:$0xf]
    %v147 = vld [vmem:[%s2 + $0x24] sm:$0xf]
    %v148 = vld [vmem:[%s2 + $0x28] sm:$0xf]
    %v149 = vld [vmem:[%s2 + $0x2c] sm:$0xf]
    %v150 = vld [vmem:[%s2 + $0x30] sm:$0xf]
    %v151 = vld [vmem:[%s2 + $0x34] sm:$0xf]
    %v152 = vld [vmem:[%s2 + $0x38] sm:$0xf]
    %v153 = vld [vmem:[%s2 + $0x3c] sm:$0xf]
    %v170 = vunpack.c.l.b16 %v138
    %v171 = vunpack.c.l.b16 %v139
    %v172 = vunpack.c.l.b16 %v140
    %v173 = vunpack.c.l.b16 %v141
    %v174 = vunpack.c.l.b16 %v142
    %v175 = vunpack.c.l.b16 %v143
    %v176 = vunpack.c.l.b16 %v144
    %v177 = vunpack.c.l.b16 %v145
    %v178 = vunpack.c.l.b16 %v146
    %v179 = vunpack.c.l.b16 %v147
    %v180 = vunpack.c.l.b16 %v148
    %v181 = vunpack.c.l.b16 %v149
    %v182 = vunpack.c.l.b16 %v150
    %v183 = vunpack.c.l.b16 %v151
    %v184 = vunpack.c.l.b16 %v152
    %v185 = vunpack.c.l.b16 %v153
    %v186 = vpack.c.b16 %v171, %v170
    %v187 = vpack.c.b16 %v173, %v172
    %v188 = vpack.c.b16 %v175, %v174
    %v189 = vpack.c.b16 %v177, %v176
    %v190 = vpack.c.b16 %v179, %v178
    %v191 = vpack.c.b16 %v181, %v180
    %v192 = vpack.c.b16 %v183, %v182
    %v193 = vpack.c.b16 %v185, %v184
    %202 = vmatprep.subr.bf16.mxu0 0
    %203 = vmatpush1.bf16.msra.mxu0 %v186
    %204 = vmatprep.subr.bf16.mxu0 0
    %205 = vmatpush1.bf16.msra.mxu0 %v187
    %206 = vmatprep.subr.bf16.mxu0 0
    %207 = vmatpush1.bf16.msra.mxu0 %v188
    %208 = vmatprep.subr.bf16.mxu0 0
    %209 = vmatpush1.bf16.msra.mxu0 %v189
    %210 = vmatprep.subr.bf16.mxu0 0
    %211 = vmatpush1.bf16.msra.mxu0 %v190
    %212 = vmatprep.subr.bf16.mxu0 0
    %213 = vmatpush1.bf16.msra.mxu0 %v191
    %214 = vmatprep.subr.bf16.mxu0 0
    %215 = vmatpush1.bf16.msra.mxu0 %v192
    %216 = vmatprep.subr.bf16.mxu0 0
    %217 = vmatpush1.bf16.msra.mxu0 %v193
    %218 = vmatprep.subr.bf16.mxu0 0
    %219 = vmatpush1.bf16.msra.mxu0 0
    %220 = vmatprep.subr.bf16.mxu0 0
    %221 = vmatpush1.bf16.msra.mxu0 0
    %222 = vmatprep.subr.bf16.mxu0 0
    %223 = vmatpush1.bf16.msra.mxu0 0
    %224 = vmatprep.subr.bf16.mxu0 0
    %225 = vmatpush1.bf16.msra.mxu0 0
    %226 = vmatprep.subr.bf16.mxu0 0
    %227 = vmatpush1.bf16.msra.mxu0 0
    %228 = vmatprep.subr.bf16.mxu0 0
    %229 = vmatpush1.bf16.msra.mxu0 0
    %230 = vmatprep.subr.bf16.mxu0 0
    %231 = vmatpush1.bf16.msra.mxu0 0
    %232 = vmatprep.subr.bf16.mxu0 0
    %233 = vmatpush1.bf16.msra.mxu0 0
    %234 = vmatprep.mubr.bf16.mxu0 0
    %235 = vmatmul.mubr.bf16.gmra.mrb[0].mxu0 %v47
    %v236 = vpop.f32.mrb[0].mxu0
    %v237 = vadd.f32 0.0, %v236
    %v238 = vpop.f32.mrb[0].mxu0
    %v239 = vpop.f32.mrb[0].mxu0
    %v240 = vadd.f32 0.0, %v239
    %v241 = vpop.f32.mrb[0].mxu0
    %242 = vdwg.mxu0
    %v243 = vld [vmem:[%s3] sm:$0xf]
    %v244 = vld [vmem:[%s3 + $0x4] sm:$0xf]
    %v245 = vld [vmem:[%s3 + $0x8] sm:$0xf]
    %v246 = vld [vmem:[%s3 + $0xc] sm:$0xf]
    %v247 = vld [vmem:[%s3 + $0x10] sm:$0xf]
    %v248 = vld [vmem:[%s3 + $0x14] sm:$0xf]
    %v249 = vld [vmem:[%s3 + $0x18] sm:$0xf]
    %v250 = vld [vmem:[%s3 + $0x1c] sm:$0xf]
    %v251 = vld [vmem:[%s3 + $0x20] sm:$0xf]
    %v252 = vld [vmem:[%s3 + $0x24] sm:$0xf]
    %v253 = vld [vmem:[%s3 + $0x28] sm:$0xf]
    %v254 = vld [vmem:[%s3 + $0x2c] sm:$0xf]
    %v255 = vld [vmem:[%s3 + $0x30] sm:$0xf]
    %v256 = vld [vmem:[%s3 + $0x34] sm:$0xf]
    %v257 = vld [vmem:[%s3 + $0x38] sm:$0xf]
    %v258 = vld [vmem:[%s3 + $0x3c] sm:$0xf]
    %v275 = vunpack.c.l.b16 %v243
    %v276 = vunpack.c.l.b16 %v244
    %v277 = vunpack.c.l.b16 %v245
    %v278 = vunpack.c.l.b16 %v246
    %v279 = vunpack.c.l.b16 %v247
    %v280 = vunpack.c.l.b16 %v248
    %v281 = vunpack.c.l.b16 %v249
    %v282 = vunpack.c.l.b16 %v250
    %v283 = vunpack.c.l.b16 %v251
    %v284 = vunpack.c.l.b16 %v252
    %v285 = vunpack.c.l.b16 %v253
    %v286 = vunpack.c.l.b16 %v254
    %v287 = vunpack.c.l.b16 %v255
    %v288 = vunpack.c.l.b16 %v256
    %v289 = vunpack.c.l.b16 %v257
    %v290 = vunpack.c.l.b16 %v258
    %v291 = vpack.c.b16 %v276, %v275
    %v292 = vpack.c.b16 %v278, %v277
    %v293 = vpack.c.b16 %v280, %v279
    %v294 = vpack.c.b16 %v282, %v281
    %v295 = vpack.c.b16 %v284, %v283
    %v296 = vpack.c.b16 %v286, %v285
    %v297 = vpack.c.b16 %v288, %v287
    %v298 = vpack.c.b16 %v290, %v289
    %307 = vmatprep.subr.bf16.mxu0 0
    %308 = vmatpush1.bf16.msra.mxu0 %v291
    %309 = vmatprep.subr.bf16.mxu0 0
    %310 = vmatpush1.bf16.msra.mxu0 %v292
    %311 = vmatprep.subr.bf16.mxu0 0
    %312 = vmatpush1.bf16.msra.mxu0 %v293
    %313 = vmatprep.subr.bf16.mxu0 0
    %314 = vmatpush1.bf16.msra.mxu0 %v294
    %315 = vmatprep.subr.bf16.mxu0 0
    %316 = vmatpush1.bf16.msra.mxu0 %v295
    %317 = vmatprep.subr.bf16.mxu0 0
    %318 = vmatpush1.bf16.msra.mxu0 %v296
    %319 = vmatprep.subr.bf16.mxu0 0
    %320 = vmatpush1.bf16.msra.mxu0 %v297
    %321 = vmatprep.subr.bf16.mxu0 0
    %322 = vmatpush1.bf16.msra.mxu0 %v298
    %323 = vmatprep.subr.bf16.mxu0 0
    %324 = vmatpush1.bf16.msra.mxu0 0
    %325 = vmatprep.subr.bf16.mxu0 0
    %326 = vmatpush1.bf16.msra.mxu0 0
    %327 = vmatprep.subr.bf16.mxu0 0
    %328 = vmatpush1.bf16.msra.mxu0 0
    %329 = vmatprep.subr.bf16.mxu0 0
    %330 = vmatpush1.bf16.msra.mxu0 0
    %331 = vmatprep.subr.bf16.mxu0 0
    %332 = vmatpush1.bf16.msra.mxu0 0
    %333 = vmatprep.subr.bf16.mxu0 0
    %334 = vmatpush1.bf16.msra.mxu0 0
    %335 = vmatprep.subr.bf16.mxu0 0
    %336 = vmatpush1.bf16.msra.mxu0 0
    %337 = vmatprep.subr.bf16.mxu0 0
    %338 = vmatpush1.bf16.msra.mxu0 0
    %339 = vmatprep.mubr.bf16.mxu0 0
    %340 = vmatmul.mubr.bf16.gmra.mrb[0].mxu0 %v47
    %v341 = vpop.f32.mrb[0].mxu0
    %v342 = vadd.f32 0.0, %v341
    %v343 = vpop.f32.mrb[0].mxu0
    %v344 = vpop.f32.mrb[0].mxu0
    %v345 = vadd.f32 0.0, %v344
    %v346 = vpop.f32.mrb[0].mxu0
    %347 = vdwg.mxu0
    %v348 = vlaneseq
    %v349 = vshrl.u32 %v348, 7
    %v350 = vlaneseq
    %v351 = vand.u32 %v350, 127
    %vm352 = vcmp.le.s32.totalorder %v351, %v349
    %v353 = vsel %vm352, 0.0, -1e+30
    %vm354 = vcmask 64512
    %v356 = vsel %vm354, %v132, 0
    %v359 = vsel %vm354, %v237, 0
    %361 = vmatprep.subr.mxu0 0.0
    %362 = vmatpush1.xpose.msra.mxu0 %v359
    %363 = vmatprep.subr.mxu0 0.0
    %364 = vmatpush1.xpose.msra.mxu0 0.0
    %365 = vmatprep.subr.mxu0 0.0
    %366 = vmatpush1.xpose.msra.mxu0 0.0
    %367 = vmatprep.subr.mxu0 0.0
    %368 = vmatpush1.xpose.msra.mxu0 0.0
    %369 = vmatprep.subr.mxu0 0.0
    %370 = vmatpush1.xpose.msra.mxu0 0.0
    %371 = vmatprep.subr.mxu0 0.0
    %372 = vmatpush1.xpose.msra.mxu0 0.0
    %373 = vmatprep.subr.mxu0 0.0
    %374 = vmatpush1.xpose.msra.mxu0 0.0
    %375 = vmatprep.subr.mxu0 0.0
    %376 = vmatpush1.xpose.msra.mxu0 0.0
    %377 = vmatprep.subr.mxu0 0.0
    %378 = vmatpush1.xpose.msra.mxu0 0.0
    %379 = vmatprep.subr.mxu0 0.0
    %380 = vmatpush1.xpose.msra.mxu0 0.0
    %381 = vmatprep.subr.mxu0 0.0
    %382 = vmatpush1.xpose.msra.mxu0 0.0
    %383 = vmatprep.subr.mxu0 0.0
    %384 = vmatpush1.xpose.msra.mxu0 0.0
    %385 = vmatprep.subr.mxu0 0.0
    %386 = vmatpush1.xpose.msra.mxu0 0.0
    %387 = vmatprep.subr.mxu0 0.0
    %388 = vmatpush1.xpose.msra.mxu0 0.0
    %389 = vmatprep.subr.mxu0 0.0
    %390 = vmatpush1.xpose.msra.mxu0 0.0
    %391 = vmatprep.subr.mxu0 0.0
    %392 = vmatpush1.xpose.msra.mxu0 0.0
    %393 = vmatprep.subr.mxu0 0.0
    %394 = vmatpush1.xpose.msra.mxu0 0.0
    %395 = vmatprep.subr.mxu0 0.0
    %396 = vmatpush1.xpose.msra.mxu0 0.0
    %397 = vmatprep.subr.mxu0 0.0
    %398 = vmatpush1.xpose.msra.mxu0 0.0
    %399 = vmatprep.subr.mxu0 0.0
    %400 = vmatpush1.xpose.msra.mxu0 0.0
    %401 = vmatprep.subr.mxu0 0.0
    %402 = vmatpush1.xpose.msra.mxu0 0.0
    %403 = vmatprep.subr.mxu0 0.0
    %404 = vmatpush1.xpose.msra.mxu0 0.0
    %405 = vmatprep.subr.mxu0 0.0
    %406 = vmatpush1.xpose.msra.mxu0 0.0
    %407 = vmatprep.subr.mxu0 0.0
    %408 = vmatpush1.xpose.msra.mxu0 0.0
    %409 = vmatprep.subr.mxu0 0.0
    %410 = vmatpush1.xpose.msra.mxu0 0.0
    %411 = vmatprep.subr.mxu0 0.0
    %412 = vmatpush1.xpose.msra.mxu0 0.0
    %413 = vmatprep.subr.mxu0 0.0
    %414 = vmatpush1.xpose.msra.mxu0 0.0
    %415 = vmatprep.subr.mxu0 0.0
    %416 = vmatpush1.xpose.msra.mxu0 0.0
    %417 = vmatprep.subr.mxu0 0.0
    %418 = vmatpush1.xpose.msra.mxu0 0.0
    %419 = vmatprep.subr.mxu0 0.0
    %420 = vmatpush1.xpose.msra.mxu0 0.0
    %421 = vmatprep.subr.mxu0 0.0
    %422 = vmatpush1.xpose.msra.mxu0 0.0
    %423 = vmatprep.subr.mxu0 0.0
    %424 = vmatpush1.xpose.msra.mxu0 0.0
    %425 = vmatprep.mubr.f32.mxu0 0.0
    %426 = vmatmul.mubr.f32.gmra.mrb[0].mxu0 %v356
    %v427 = vpop.f32.mrb[0].mxu0
    %v428 = vadd.f32 %v353, %v427
    %v429 = vpop.f32.mrb[0].mxu0
    %430 = vdwg.mxu0
    %v431 = vsel %vm354, %v428, -inf
    %432 = vmax.xlane.f32.xlu0 %v431
    %v433 = vpop.xlane.xlu0 %432
    %v434 = vsub.f32 %v428, %v433
    %v435 = vmul.f32 %v434, 1.442695
    %v436 = vpow.pop %v435
    %v437 = vsel %vm354, %v436, 0.0
    %438 = vadd.xlane.f32.xlu0 %v437
    %v439 = vpop.xlane.xlu0 %438
    %v440 = vrcp.pop %v439
    %v441 = vmul.f32 %v436, %v440
    %v443 = vsel %vm354, %v441, 0
    %445 = vmatprep.subr.mxu0 0.0
    %446 = vmatpush1.msra.mxu0 %v342
    %447 = vmatprep.subr.mxu0 0.0
    %448 = vmatpush1.msra.mxu0 0.0
    %449 = vmatprep.subr.mxu0 0.0
    %450 = vmatpush1.msra.mxu0 0.0
    %451 = vmatprep.subr.mxu0 0.0
    %452 = vmatpush1.msra.mxu0 0.0
    %453 = vmatprep.subr.mxu0 0.0
    %454 = vmatpush1.msra.mxu0 0.0
    %455 = vmatprep.subr.mxu0 0.0
    %456 = vmatpush1.msra.mxu0 0.0
    %457 = vmatprep.subr.mxu0 0.0
    %458 = vmatpush1.msra.mxu0 0.0
    %459 = vmatprep.subr.mxu0 0.0
    %460 = vmatpush1.msra.mxu0 0.0
    %461 = vmatprep.subr.mxu0 0.0
    %462 = vmatpush1.msra.mxu0 0.0
    %463 = vmatprep.subr.mxu0 0.0
    %464 = vmatpush1.msra.mxu0 0.0
    %465 = vmatprep.subr.mxu0 0.0
    %466 = vmatpush1.msra.mxu0 0.0
    %467 = vmatprep.subr.mxu0 0.0
    %468 = vmatpush1.msra.mxu0 0.0
    %469 = vmatprep.subr.mxu0 0.0
    %470 = vmatpush1.msra.mxu0 0.0
    %471 = vmatprep.subr.mxu0 0.0
    %472 = vmatpush1.msra.mxu0 0.0
    %473 = vmatprep.subr.mxu0 0.0
    %474 = vmatpush1.msra.mxu0 0.0
    %475 = vmatprep.subr.mxu0 0.0
    %476 = vmatpush1.msra.mxu0 0.0
    %477 = vmatprep.subr.mxu0 0.0
    %478 = vmatpush1.msra.mxu0 0.0
    %479 = vmatprep.subr.mxu0 0.0
    %480 = vmatpush1.msra.mxu0 0.0
    %481 = vmatprep.subr.mxu0 0.0
    %482 = vmatpush1.msra.mxu0 0.0
    %483 = vmatprep.subr.mxu0 0.0
    %484 = vmatpush1.msra.mxu0 0.0
    %485 = vmatprep.subr.mxu0 0.0
    %486 = vmatpush1.msra.mxu0 0.0
    %487 = vmatprep.subr.mxu0 0.0
    %488 = vmatpush1.msra.mxu0 0.0
    %489 = vmatprep.subr.mxu0 0.0
    %490 = vmatpush1.msra.mxu0 0.0
    %491 = vmatprep.subr.mxu0 0.0
    %492 = vmatpush1.msra.mxu0 0.0
    %493 = vmatprep.subr.mxu0 0.0
    %494 = vmatpush1.msra.mxu0 0.0
    %495 = vmatprep.subr.mxu0 0.0
    %496 = vmatpush1.msra.mxu0 0.0
    %497 = vmatprep.subr.mxu0 0.0
    %498 = vmatpush1.msra.mxu0 0.0
    %499 = vmatprep.subr.mxu0 0.0
    %500 = vmatpush1.msra.mxu0 0.0
    %501 = vmatprep.subr.mxu0 0.0
    %502 = vmatpush1.msra.mxu0 0.0
    %503 = vmatprep.subr.mxu0 0.0
    %504 = vmatpush1.msra.mxu0 0.0
    %505 = vmatprep.subr.mxu0 0.0
    %506 = vmatpush1.msra.mxu0 0.0
    %507 = vmatprep.subr.mxu0 0.0
    %508 = vmatpush1.msra.mxu0 0.0
    %509 = vmatprep.mubr.f32.mxu0 0.0
    %510 = vmatmul.mubr.f32.gmra.mrb[0].mxu0 %v443
    %v511 = vpop.f32.mrb[0].mxu0
    %v512 = vadd.f32 0.0, %v511
    %v513 = vpop.f32.mrb[0].mxu0
    %514 = vdwg.mxu0
    %515 = vrot.lane.b32.xlu0 %v132, 120
    %v516 = vpop.permute.xlu0 %515
    %517 = vrot.lane.b32.xlu0 %v237, 120
    %v518 = vpop.permute.xlu0 %517
    %v519 = vsel %vm354, %v516, 0
    %v521 = vsel %vm354, %v518, 0
    %523 = vmatprep.subr.mxu0 0.0
    %524 = vmatpush1.xpose.msra.mxu0 %v521
    %525 = vmatprep.subr.mxu0 0.0
    %526 = vmatpush1.xpose.msra.mxu0 0.0
    %527 = vmatprep.subr.mxu0 0.0
    %528 = vmatpush1.xpose.msra.mxu0 0.0
    %529 = vmatprep.subr.mxu0 0.0
    %530 = vmatpush1.xpose.msra.mxu0 0.0
    %531 = vmatprep.subr.mxu0 0.0
    %532 = vmatpush1.xpose.msra.mxu0 0.0
    %533 = vmatprep.subr.mxu0 0.0
    %534 = vmatpush1.xpose.msra.mxu0 0.0
    %535 = vmatprep.subr.mxu0 0.0
    %536 = vmatpush1.xpose.msra.mxu0 0.0
    %537 = vmatprep.subr.mxu0 0.0
    %538 = vmatpush1.xpose.msra.mxu0 0.0
    %539 = vmatprep.subr.mxu0 0.0
    %540 = vmatpush1.xpose.msra.mxu0 0.0
    %541 = vmatprep.subr.mxu0 0.0
    %542 = vmatpush1.xpose.msra.mxu0 0.0
    %543 = vmatprep.subr.mxu0 0.0
    %544 = vmatpush1.xpose.msra.mxu0 0.0
    %545 = vmatprep.subr.mxu0 0.0
    %546 = vmatpush1.xpose.msra.mxu0 0.0
    %547 = vmatprep.subr.mxu0 0.0
    %548 = vmatpush1.xpose.msra.mxu0 0.0
    %549 = vmatprep.subr.mxu0 0.0
    %550 = vmatpush1.xpose.msra.mxu0 0.0
    %551 = vmatprep.subr.mxu0 0.0
    %552 = vmatpush1.xpose.msra.mxu0 0.0
    %553 = vmatprep.subr.mxu0 0.0
    %554 = vmatpush1.xpose.msra.mxu0 0.0
    %555 = vmatprep.subr.mxu0 0.0
    %556 = vmatpush1.xpose.msra.mxu0 0.0
    %557 = vmatprep.subr.mxu0 0.0
    %558 = vmatpush1.xpose.msra.mxu0 0.0
    %559 = vmatprep.subr.mxu0 0.0
    %560 = vmatpush1.xpose.msra.mxu0 0.0
    %561 = vmatprep.subr.mxu0 0.0
    %562 = vmatpush1.xpose.msra.mxu0 0.0
    %563 = vmatprep.subr.mxu0 0.0
    %564 = vmatpush1.xpose.msra.mxu0 0.0
    %565 = vmatprep.subr.mxu0 0.0
    %566 = vmatpush1.xpose.msra.mxu0 0.0
    %567 = vmatprep.subr.mxu0 0.0
    %568 = vmatpush1.xpose.msra.mxu0 0.0
    %569 = vmatprep.subr.mxu0 0.0
    %570 = vmatpush1.xpose.msra.mxu0 0.0
    %571 = vmatprep.subr.mxu0 0.0
    %572 = vmatpush1.xpose.msra.mxu0 0.0
    %573 = vmatprep.subr.mxu0 0.0
    %574 = vmatpush1.xpose.msra.mxu0 0.0
    %575 = vmatprep.subr.mxu0 0.0
    %576 = vmatpush1.xpose.msra.mxu0 0.0
    %577 = vmatprep.subr.mxu0 0.0
    %578 = vmatpush1.xpose.msra.mxu0 0.0
    %579 = vmatprep.subr.mxu0 0.0
    %580 = vmatpush1.xpose.msra.mxu0 0.0
    %581 = vmatprep.subr.mxu0 0.0
    %582 = vmatpush1.xpose.msra.mxu0 0.0
    %583 = vmatprep.subr.mxu0 0.0
    %584 = vmatpush1.xpose.msra.mxu0 0.0
    %585 = vmatprep.subr.mxu0 0.0
    %586 = vmatpush1.xpose.msra.mxu0 0.0
    %587 = vmatprep.mubr.f32.mxu0 0.0
    %588 = vmatmul.mubr.f32.gmra.mrb[0].mxu0 %v519
    %v589 = vpop.f32.mrb[0].mxu0
    %v590 = vadd.f32 %v353, %v589
    %v591 = vpop.f32.mrb[0].mxu0
    %592 = vdwg.mxu0
    %v593 = vsel %vm354, %v590, -inf
    %594 = vmax.xlane.f32.xlu0 %v593
    %v595 = vpop.xlane.xlu0 %594
    %v596 = vsub.f32 %v590, %v595
    %v597 = vmul.f32 %v596, 1.442695
    %v598 = vpow.pop %v597
    %v599 = vsel %vm354, %v598, 0.0
    %600 = vadd.xlane.f32.xlu0 %v599
    %v601 = vpop.xlane.xlu0 %600
    %v602 = vrcp.pop %v601
    %v603 = vmul.f32 %v598, %v602
    %605 = vrot.lane.b32.xlu0 %v342, 120
    %v606 = vpop.permute.xlu0 %605
    %v609 = vsel %vm354, %v603, 0
    %611 = vmatprep.subr.mxu0 0.0
    %612 = vmatpush1.msra.mxu0 %v606
    %613 = vmatprep.subr.mxu0 0.0
    %614 = vmatpush1.msra.mxu0 0.0
    %615 = vmatprep.subr.mxu0 0.0
    %616 = vmatpush1.msra.mxu0 0.0
    %617 = vmatprep.subr.mxu0 0.0
    %618 = vmatpush1.msra.mxu0 0.0
    %619 = vmatprep.subr.mxu0 0.0
    %620 = vmatpush1.msra.mxu0 0.0
    %621 = vmatprep.subr.mxu0 0.0
    %622 = vmatpush1.msra.mxu0 0.0
    %623 = vmatprep.subr.mxu0 0.0
    %624 = vmatpush1.msra.mxu0 0.0
    %625 = vmatprep.subr.mxu0 0.0
    %626 = vmatpush1.msra.mxu0 0.0
    %627 = vmatprep.subr.mxu0 0.0
    %628 = vmatpush1.msra.mxu0 0.0
    %629 = vmatprep.subr.mxu0 0.0
    %630 = vmatpush1.msra.mxu0 0.0
    %631 = vmatprep.subr.mxu0 0.0
    %632 = vmatpush1.msra.mxu0 0.0
    %633 = vmatprep.subr.mxu0 0.0
    %634 = vmatpush1.msra.mxu0 0.0
    %635 = vmatprep.subr.mxu0 0.0
    %636 = vmatpush1.msra.mxu0 0.0
    %637 = vmatprep.subr.mxu0 0.0
    %638 = vmatpush1.msra.mxu0 0.0
    %639 = vmatprep.subr.mxu0 0.0
    %640 = vmatpush1.msra.mxu0 0.0
    %641 = vmatprep.subr.mxu0 0.0
    %642 = vmatpush1.msra.mxu0 0.0
    %643 = vmatprep.subr.mxu0 0.0
    %644 = vmatpush1.msra.mxu0 0.0
    %645 = vmatprep.subr.mxu0 0.0
    %646 = vmatpush1.msra.mxu0 0.0
    %647 = vmatprep.subr.mxu0 0.0
    %648 = vmatpush1.msra.mxu0 0.0
    %649 = vmatprep.subr.mxu0 0.0
    %650 = vmatpush1.msra.mxu0 0.0
    %651 = vmatprep.subr.mxu0 0.0
    %652 = vmatpush1.msra.mxu0 0.0
    %653 = vmatprep.subr.mxu0 0.0
    %654 = vmatpush1.msra.mxu0 0.0
    %655 = vmatprep.subr.mxu0 0.0
    %656 = vmatpush1.msra.mxu0 0.0
    %657 = vmatprep.subr.mxu0 0.0
    %658 = vmatpush1.msra.mxu0 0.0
    %659 = vmatprep.subr.mxu0 0.0
    %660 = vmatpush1.msra.mxu0 0.0
    %661 = vmatprep.subr.mxu0 0.0
    %662 = vmatpush1.msra.mxu0 0.0
    %663 = vmatprep.subr.mxu0 0.0
    %664 = vmatpush1.msra.mxu0 0.0
    %665 = vmatprep.subr.mxu0 0.0
    %666 = vmatpush1.msra.mxu0 0.0
    %667 = vmatprep.subr.mxu0 0.0
    %668 = vmatpush1.msra.mxu0 0.0
    %669 = vmatprep.subr.mxu0 0.0
    %670 = vmatpush1.msra.mxu0 0.0
    %671 = vmatprep.subr.mxu0 0.0
    %672 = vmatpush1.msra.mxu0 0.0
    %673 = vmatprep.subr.mxu0 0.0
    %674 = vmatpush1.msra.mxu0 0.0
    %675 = vmatprep.mubr.f32.mxu0 0.0
    %676 = vmatmul.mubr.f32.gmra.mrb[0].mxu0 %v609
    %v677 = vpop.f32.mrb[0].mxu0
    %v678 = vadd.f32 0.0, %v677
    %v679 = vpop.f32.mrb[0].mxu0
    %680 = vdwg.mxu0
    %681 = vrot.lane.b32.xlu0 %v132, 112
    %v682 = vpop.permute.xlu0 %681
    %683 = vrot.lane.b32.xlu0 %v237, 112
    %v684 = vpop.permute.xlu0 %683
    %v685 = vsel %vm354, %v682, 0
    %v687 = vsel %vm354, %v684, 0
    %689 = vmatprep.subr.mxu0 0.0
    %690 = vmatpush1.xpose.msra.mxu0 %v687
    %691 = vmatprep.subr.mxu0 0.0
    %692 = vmatpush1.xpose.msra.mxu0 0.0
    %693 = vmatprep.subr.mxu0 0.0
    %694 = vmatpush1.xpose.msra.mxu0 0.0
    %695 = vmatprep.subr.mxu0 0.0
    %696 = vmatpush1.xpose.msra.mxu0 0.0
    %697 = vmatprep.subr.mxu0 0.0
    %698 = vmatpush1.xpose.msra.mxu0 0.0
    %699 = vmatprep.subr.mxu0 0.0
    %700 = vmatpush1.xpose.msra.mxu0 0.0
    %701 = vmatprep.subr.mxu0 0.0
    %702 = vmatpush1.xpose.msra.mxu0 0.0
    %703 = vmatprep.subr.mxu0 0.0
    %704 = vmatpush1.xpose.msra.mxu0 0.0
    %705 = vmatprep.subr.mxu0 0.0
    %706 = vmatpush1.xpose.msra.mxu0 0.0
    %707 = vmatprep.subr.mxu0 0.0
    %708 = vmatpush1.xpose.msra.mxu0 0.0
    %709 = vmatprep.subr.mxu0 0.0
    %710 = vmatpush1.xpose.msra.mxu0 0.0
    %711 = vmatprep.subr.mxu0 0.0
    %712 = vmatpush1.xpose.msra.mxu0 0.0
    %713 = vmatprep.subr.mxu0 0.0
    %714 = vmatpush1.xpose.msra.mxu0 0.0
    %715 = vmatprep.subr.mxu0 0.0
    %716 = vmatpush1.xpose.msra.mxu0 0.0
    %717 = vmatprep.subr.mxu0 0.0
    %718 = vmatpush1.xpose.msra.mxu0 0.0
    %719 = vmatprep.subr.mxu0 0.0
    %720 = vmatpush1.xpose.msra.mxu0 0.0
    %721 = vmatprep.subr.mxu0 0.0
    %722 = vmatpush1.xpose.msra.mxu0 0.0
    %723 = vmatprep.subr.mxu0 0.0
    %724 = vmatpush1.xpose.msra.mxu0 0.0
    %725 = vmatprep.subr.mxu0 0.0
    %726 = vmatpush1.xpose.msra.mxu0 0.0
    %727 = vmatprep.subr.mxu0 0.0
    %728 = vmatpush1.xpose.msra.mxu0 0.0
    %729 = vmatprep.subr.mxu0 0.0
    %730 = vmatpush1.xpose.msra.mxu0 0.0
    %731 = vmatprep.subr.mxu0 0.0
    %732 = vmatpush1.xpose.msra.mxu0 0.0
    %733 = vmatprep.subr.mxu0 0.0
    %734 = vmatpush1.xpose.msra.mxu0 0.0
    %735 = vmatprep.subr.mxu0 0.0
    %736 = vmatpush1.xpose.msra.mxu0 0.0
    %737 = vmatprep.subr.mxu0 0.0
    %738 = vmatpush1.xpose.msra.mxu0 0.0
    %739 = vmatprep.subr.mxu0 0.0
    %740 = vmatpush1.xpose.msra.mxu0 0.0
    %741 = vmatprep.subr.mxu0 0.0
    %742 = vmatpush1.xpose.msra.mxu0 0.0
    %743 = vmatprep.subr.mxu0 0.0
    %744 = vmatpush1.xpose.msra.mxu0 0.0
    %745 = vmatprep.subr.mxu0 0.0
    %746 = vmatpush1.xpose.msra.mxu0 0.0
    %747 = vmatprep.subr.mxu0 0.0
    %748 = vmatpush1.xpose.msra.mxu0 0.0
    %749 = vmatprep.subr.mxu0 0.0
    %750 = vmatpush1.xpose.msra.mxu0 0.0
    %751 = vmatprep.subr.mxu0 0.0
    %752 = vmatpush1.xpose.msra.mxu0 0.0
    %753 = vmatprep.mubr.f32.mxu0 0.0
    %754 = vmatmul.mubr.f32.gmra.mrb[0].mxu0 %v685
    %v755 = vpop.f32.mrb[0].mxu0
    %v756 = vadd.f32 %v353, %v755
    %v757 = vpop.f32.mrb[0].mxu0
    %758 = vdwg.mxu0
    %v759 = vsel %vm354, %v756, -inf
    %760 = vmax.xlane.f32.xlu0 %v759
    %v761 = vpop.xlane.xlu0 %760
    %v762 = vsub.f32 %v756, %v761
    %v763 = vmul.f32 %v762, 1.442695
    %v764 = vpow.pop %v763
    %v765 = vsel %vm354, %v764, 0.0
    %766 = vadd.xlane.f32.xlu0 %v765
    %v767 = vpop.xlane.xlu0 %766
    %v768 = vrcp.pop %v767
    %v769 = vmul.f32 %v764, %v768
    %770 = vrot.lane.b32.xlu0 %v342, 112
    %v771 = vpop.permute.xlu0 %770
    %v774 = vsel %vm354, %v769, 0
    %776 = vmatprep.subr.mxu0 0.0
    %777 = vmatpush1.msra.mxu0 %v771
    %778 = vmatprep.subr.mxu0 0.0
    %779 = vmatpush1.msra.mxu0 0.0
    %780 = vmatprep.subr.mxu0 0.0
    %781 = vmatpush1.msra.mxu0 0.0
    %782 = vmatprep.subr.mxu0 0.0
    %783 = vmatpush1.msra.mxu0 0.0
    %784 = vmatprep.subr.mxu0 0.0
    %785 = vmatpush1.msra.mxu0 0.0
    %786 = vmatprep.subr.mxu0 0.0
    %787 = vmatpush1.msra.mxu0 0.0
    %788 = vmatprep.subr.mxu0 0.0
    %789 = vmatpush1.msra.mxu0 0.0
    %790 = vmatprep.subr.mxu0 0.0
    %791 = vmatpush1.msra.mxu0 0.0
    %792 = vmatprep.subr.mxu0 0.0
    %793 = vmatpush1.msra.mxu0 0.0
    %794 = vmatprep.subr.mxu0 0.0
    %795 = vmatpush1.msra.mxu0 0.0
    %796 = vmatprep.subr.mxu0 0.0
    %797 = vmatpush1.msra.mxu0 0.0
    %798 = vmatprep.subr.mxu0 0.0
    %799 = vmatpush1.msra.mxu0 0.0
    %800 = vmatprep.subr.mxu0 0.0
    %801 = vmatpush1.msra.mxu0 0.0
    %802 = vmatprep.subr.mxu0 0.0
    %803 = vmatpush1.msra.mxu0 0.0
    %804 = vmatprep.subr.mxu0 0.0
    %805 = vmatpush1.msra.mxu0 0.0
    %806 = vmatprep.subr.mxu0 0.0
    %807 = vmatpush1.msra.mxu0 0.0
    %808 = vmatprep.subr.mxu0 0.0
    %809 = vmatpush1.msra.mxu0 0.0
    %810 = vmatprep.subr.mxu0 0.0
    %811 = vmatpush1.msra.mxu0 0.0
    %812 = vmatprep.subr.mxu0 0.0
    %813 = vmatpush1.msra.mxu0 0.0
    %814 = vmatprep.subr.mxu0 0.0
    %815 = vmatpush1.msra.mxu0 0.0
    %816 = vmatprep.subr.mxu0 0.0
    %817 = vmatpush1.msra.mxu0 0.0
    %818 = vmatprep.subr.mxu0 0.0
    %819 = vmatpush1.msra.mxu0 0.0
    %820 = vmatprep.subr.mxu0 0.0
    %821 = vmatpush1.msra.mxu0 0.0
    %822 = vmatprep.subr.mxu0 0.0
    %823 = vmatpush1.msra.mxu0 0.0
    %824 = vmatprep.subr.mxu0 0.0
    %825 = vmatpush1.msra.mxu0 0.0
    %826 = vmatprep.subr.mxu0 0.0
    %827 = vmatpush1.msra.mxu0 0.0
    %828 = vmatprep.subr.mxu0 0.0
    %829 = vmatpush1.msra.mxu0 0.0
    %830 = vmatprep.subr.mxu0 0.0
    %831 = vmatpush1.msra.mxu0 0.0
    %832 = vmatprep.subr.mxu0 0.0
    %833 = vmatpush1.msra.mxu0 0.0
    %834 = vmatprep.subr.mxu0 0.0
    %835 = vmatpush1.msra.mxu0 0.0
    %836 = vmatprep.subr.mxu0 0.0
    %837 = vmatpush1.msra.mxu0 0.0
    %838 = vmatprep.subr.mxu0 0.0
    %839 = vmatpush1.msra.mxu0 0.0
    %840 = vmatprep.mubr.f32.mxu0 0.0
    %841 = vmatmul.mubr.f32.gmra.mrb[0].mxu0 %v774
    %v842 = vpop.f32.mrb[0].mxu0
    %v843 = vadd.f32 0.0, %v842
    %v844 = vpop.f32.mrb[0].mxu0
    %845 = vdwg.mxu0
    %846 = vrot.lane.b32.xlu0 %v132, 104
    %v847 = vpop.permute.xlu0 %846
    %848 = vrot.lane.b32.xlu0 %v237, 104
    %v849 = vpop.permute.xlu0 %848
    %v850 = vsel %vm354, %v847, 0
    %v852 = vsel %vm354, %v849, 0
    %854 = vmatprep.subr.mxu0 0.0
    %855 = vmatpush1.xpose.msra.mxu0 %v852
    %856 = vmatprep.subr.mxu0 0.0
    %857 = vmatpush1.xpose.msra.mxu0 0.0
    %858 = vmatprep.subr.mxu0 0.0
    %859 = vmatpush1.xpose.msra.mxu0 0.0
    %860 = vmatprep.subr.mxu0 0.0
    %861 = vmatpush1.xpose.msra.mxu0 0.0
    %862 = vmatprep.subr.mxu0 0.0
    %863 = vmatpush1.xpose.msra.mxu0 0.0
    %864 = vmatprep.subr.mxu0 0.0
    %865 = vmatpush1.xpose.msra.mxu0 0.0
    %866 = vmatprep.subr.mxu0 0.0
    %867 = vmatpush1.xpose.msra.mxu0 0.0
    %868 = vmatprep.subr.mxu0 0.0
    %869 = vmatpush1.xpose.msra.mxu0 0.0
    %870 = vmatprep.subr.mxu0 0.0
    %871 = vmatpush1.xpose.msra.mxu0 0.0
    %872 = vmatprep.subr.mxu0 0.0
    %873 = vmatpush1.xpose.msra.mxu0 0.0
    %874 = vmatprep.subr.mxu0 0.0
    %875 = vmatpush1.xpose.msra.mxu0 0.0
    %876 = vmatprep.subr.mxu0 0.0
    %877 = vmatpush1.xpose.msra.mxu0 0.0
    %878 = vmatprep.subr.mxu0 0.0
    %879 = vmatpush1.xpose.msra.mxu0 0.0
    %880 = vmatprep.subr.mxu0 0.0
    %881 = vmatpush1.xpose.msra.mxu0 0.0
    %882 = vmatprep.subr.mxu0 0.0
    %883 = vmatpush1.xpose.msra.mxu0 0.0
    %884 = vmatprep.subr.mxu0 0.0
    %885 = vmatpush1.xpose.msra.mxu0 0.0
    %886 = vmatprep.subr.mxu0 0.0
    %887 = vmatpush1.xpose.msra.mxu0 0.0
    %888 = vmatprep.subr.mxu0 0.0
    %889 = vmatpush1.xpose.msra.mxu0 0.0
    %890 = vmatprep.subr.mxu0 0.0
    %891 = vmatpush1.xpose.msra.mxu0 0.0
    %892 = vmatprep.subr.mxu0 0.0
    %893 = vmatpush1.xpose.msra.mxu0 0.0
    %894 = vmatprep.subr.mxu0 0.0
    %895 = vmatpush1.xpose.msra.mxu0 0.0
    %896 = vmatprep.subr.mxu0 0.0
    %897 = vmatpush1.xpose.msra.mxu0 0.0
    %898 = vmatprep.subr.mxu0 0.0
    %899 = vmatpush1.xpose.msra.mxu0 0.0
    %900 = vmatprep.subr.mxu0 0.0
    %901 = vmatpush1.xpose.msra.mxu0 0.0
    %902 = vmatprep.subr.mxu0 0.0
    %903 = vmatpush1.xpose.msra.mxu0 0.0
    %904 = vmatprep.subr.mxu0 0.0
    %905 = vmatpush1.xpose.msra.mxu0 0.0
    %906 = vmatprep.subr.mxu0 0.0
    %907 = vmatpush1.xpose.msra.mxu0 0.0
    %908 = vmatprep.subr.mxu0 0.0
    %909 = vmatpush1.xpose.msra.mxu0 0.0
    %910 = vmatprep.subr.mxu0 0.0
    %911 = vmatpush1.xpose.msra.mxu0 0.0
    %912 = vmatprep.subr.mxu0 0.0
    %913 = vmatpush1.xpose.msra.mxu0 0.0
    %914 = vmatprep.subr.mxu0 0.0
    %915 = vmatpush1.xpose.msra.mxu0 0.0
    %916 = vmatprep.subr.mxu0 0.0
    %917 = vmatpush1.xpose.msra.mxu0 0.0
    %918 = vmatprep.mubr.f32.mxu0 0.0
    %919 = vmatmul.mubr.f32.gmra.mrb[0].mxu0 %v850
    %v920 = vpop.f32.mrb[0].mxu0
    %v921 = vadd.f32 %v353, %v920
    %v922 = vpop.f32.mrb[0].mxu0
    %923 = vdwg.mxu0
    %v924 = vsel %vm354, %v921, -inf
    %925 = vmax.xlane.f32.xlu0 %v924
    %v926 = vpop.xlane.xlu0 %925
    %v927 = vsub.f32 %v921, %v926
    %v928 = vmul.f32 %v927, 1.442695
    %v929 = vpow.pop %v928
    %v930 = vsel %vm354, %v929, 0.0
    %931 = vadd.xlane.f32.xlu0 %v930
    %v932 = vpop.xlane.xlu0 %931
    %v933 = vrcp.pop %v932
    %v934 = vmul.f32 %v929, %v933
    %935 = vrot.lane.b32.xlu0 %v342, 104
    %v936 = vpop.permute.xlu0 %935
    %v939 = vsel %vm354, %v934, 0
    %941 = vmatprep.subr.mxu0 0.0
    %942 = vmatpush1.msra.mxu0 %v936
    %943 = vmatprep.subr.mxu0 0.0
    %944 = vmatpush1.msra.mxu0 0.0
    %945 = vmatprep.subr.mxu0 0.0
    %946 = vmatpush1.msra.mxu0 0.0
    %947 = vmatprep.subr.mxu0 0.0
    %948 = vmatpush1.msra.mxu0 0.0
    %949 = vmatprep.subr.mxu0 0.0
    %950 = vmatpush1.msra.mxu0 0.0
    %951 = vmatprep.subr.mxu0 0.0
    %952 = vmatpush1.msra.mxu0 0.0
    %953 = vmatprep.subr.mxu0 0.0
    %954 = vmatpush1.msra.mxu0 0.0
    %955 = vmatprep.subr.mxu0 0.0
    %956 = vmatpush1.msra.mxu0 0.0
    %957 = vmatprep.subr.mxu0 0.0
    %958 = vmatpush1.msra.mxu0 0.0
    %959 = vmatprep.subr.mxu0 0.0
    %960 = vmatpush1.msra.mxu0 0.0
    %961 = vmatprep.subr.mxu0 0.0
    %962 = vmatpush1.msra.mxu0 0.0
    %963 = vmatprep.subr.mxu0 0.0
    %964 = vmatpush1.msra.mxu0 0.0
    %965 = vmatprep.subr.mxu0 0.0
    %966 = vmatpush1.msra.mxu0 0.0
    %967 = vmatprep.subr.mxu0 0.0
    %968 = vmatpush1.msra.mxu0 0.0
    %969 = vmatprep.subr.mxu0 0.0
    %970 = vmatpush1.msra.mxu0 0.0
    %971 = vmatprep.subr.mxu0 0.0
    %972 = vmatpush1.msra.mxu0 0.0
    %973 = vmatprep.subr.mxu0 0.0
    %974 = vmatpush1.msra.mxu0 0.0
    %975 = vmatprep.subr.mxu0 0.0
    %976 = vmatpush1.msra.mxu0 0.0
    %977 = vmatprep.subr.mxu0 0.0
    %978 = vmatpush1.msra.mxu0 0.0
    %979 = vmatprep.subr.mxu0 0.0
    %980 = vmatpush1.msra.mxu0 0.0
    %981 = vmatprep.subr.mxu0 0.0
    %982 = vmatpush1.msra.mxu0 0.0
    %983 = vmatprep.subr.mxu0 0.0
    %984 = vmatpush1.msra.mxu0 0.0
    %985 = vmatprep.subr.mxu0 0.0
    %986 = vmatpush1.msra.mxu0 0.0
    %987 = vmatprep.subr.mxu0 0.0
    %988 = vmatpush1.msra.mxu0 0.0
    %989 = vmatprep.subr.mxu0 0.0
    %990 = vmatpush1.msra.mxu0 0.0
    %991 = vmatprep.subr.mxu0 0.0
    %992 = vmatpush1.msra.mxu0 0.0
    %993 = vmatprep.subr.mxu0 0.0
    %994 = vmatpush1.msra.mxu0 0.0
    %995 = vmatprep.subr.mxu0 0.0
    %996 = vmatpush1.msra.mxu0 0.0
    %997 = vmatprep.subr.mxu0 0.0
    %998 = vmatpush1.msra.mxu0 0.0
    %999 = vmatprep.subr.mxu0 0.0
    %1000 = vmatpush1.msra.mxu0 0.0
    %1001 = vmatprep.subr.mxu0 0.0
    %1002 = vmatpush1.msra.mxu0 0.0
    %1003 = vmatprep.subr.mxu0 0.0
    %1004 = vmatpush1.msra.mxu0 0.0
    %1005 = vmatprep.mubr.f32.mxu0 0.0
    %1006 = vmatmul.mubr.f32.gmra.mrb[0].mxu0 %v939
    %v1007 = vpop.f32.mrb[0].mxu0
    %v1008 = vadd.f32 0.0, %v1007
    %v1009 = vpop.f32.mrb[0].mxu0
    %1010 = vdwg.mxu0
    %1012 = vrot.lane.b32.xlu0 %v678, 8
    %v1013 = vpop.permute.xlu0 %1012
    %1016 = vrot.lane.b32.xlu0 %v843, 16
    %v1017 = vpop.permute.xlu0 %1016
    %1020 = vrot.lane.b32.xlu0 %v1008, 24
    %v1021 = vpop.permute.xlu0 %1020
    %v1023 = vsel %vm354, %v512, %v1013
    %vm1024 = vcmask 130048
    %v1025 = vsel %vm1024, %v1023, %v1017
    %vm1026 = vcmask 195584
    %v1027 = vsel %vm1026, %v1025, %v1021
    %v1029 = vsel %vm354, %v135, 0
    %v1032 = vsel %vm354, %v240, 0
    %1034 = vmatprep.subr.mxu0 0.0
    %1035 = vmatpush1.xpose.msra.mxu0 %v1032
    %1036 = vmatprep.subr.mxu0 0.0
    %1037 = vmatpush1.xpose.msra.mxu0 0.0
    %1038 = vmatprep.subr.mxu0 0.0
    %1039 = vmatpush1.xpose.msra.mxu0 0.0
    %1040 = vmatprep.subr.mxu0 0.0
    %1041 = vmatpush1.xpose.msra.mxu0 0.0
    %1042 = vmatprep.subr.mxu0 0.0
    %1043 = vmatpush1.xpose.msra.mxu0 0.0
    %1044 = vmatprep.subr.mxu0 0.0
    %1045 = vmatpush1.xpose.msra.mxu0 0.0
    %1046 = vmatprep.subr.mxu0 0.0
    %1047 = vmatpush1.xpose.msra.mxu0 0.0
    %1048 = vmatprep.subr.mxu0 0.0
    %1049 = vmatpush1.xpose.msra.mxu0 0.0
    %1050 = vmatprep.subr.mxu0 0.0
    %1051 = vmatpush1.xpose.msra.mxu0 0.0
    %1052 = vmatprep.subr.mxu0 0.0
    %1053 = vmatpush1.xpose.msra.mxu0 0.0
    %1054 = vmatprep.subr.mxu0 0.0
    %1055 = vmatpush1.xpose.msra.mxu0 0.0
    %1056 = vmatprep.subr.mxu0 0.0
    %1057 = vmatpush1.xpose.msra.mxu0 0.0
    %1058 = vmatprep.subr.mxu0 0.0
    %1059 = vmatpush1.xpose.msra.mxu0 0.0
    %1060 = vmatprep.subr.mxu0 0.0
    %1061 = vmatpush1.xpose.msra.mxu0 0.0
    %1062 = vmatprep.subr.mxu0 0.0
    %1063 = vmatpush1.xpose.msra.mxu0 0.0
    %1064 = vmatprep.subr.mxu0 0.0
    %1065 = vmatpush1.xpose.msra.mxu0 0.0
    %1066 = vmatprep.subr.mxu0 0.0
    %1067 = vmatpush1.xpose.msra.mxu0 0.0
    %1068 = vmatprep.subr.mxu0 0.0
    %1069 = vmatpush1.xpose.msra.mxu0 0.0
    %1070 = vmatprep.subr.mxu0 0.0
    %1071 = vmatpush1.xpose.msra.mxu0 0.0
    %1072 = vmatprep.subr.mxu0 0.0
    %1073 = vmatpush1.xpose.msra.mxu0 0.0
    %1074 = vmatprep.subr.mxu0 0.0
    %1075 = vmatpush1.xpose.msra.mxu0 0.0
    %1076 = vmatprep.subr.mxu0 0.0
    %1077 = vmatpush1.xpose.msra.mxu0 0.0
    %1078 = vmatprep.subr.mxu0 0.0
    %1079 = vmatpush1.xpose.msra.mxu0 0.0
    %1080 = vmatprep.subr.mxu0 0.0
    %1081 = vmatpush1.xpose.msra.mxu0 0.0
    %1082 = vmatprep.subr.mxu0 0.0
    %1083 = vmatpush1.xpose.msra.mxu0 0.0
    %1084 = vmatprep.subr.mxu0 0.0
    %1085 = vmatpush1.xpose.msra.mxu0 0.0
    %1086 = vmatprep.subr.mxu0 0.0
    %1087 = vmatpush1.xpose.msra.mxu0 0.0
    %1088 = vmatprep.subr.mxu0 0.0
    %1089 = vmatpush1.xpose.msra.mxu0 0.0
    %1090 = vmatprep.subr.mxu0 0.0
    %1091 = vmatpush1.xpose.msra.mxu0 0.0
    %1092 = vmatprep.subr.mxu0 0.0
    %1093 = vmatpush1.xpose.msra.mxu0 0.0
    %1094 = vmatprep.subr.mxu0 0.0
    %1095 = vmatpush1.xpose.msra.mxu0 0.0
    %1096 = vmatprep.subr.mxu0 0.0
    %1097 = vmatpush1.xpose.msra.mxu0 0.0
    %1098 = vmatprep.mubr.f32.mxu0 0.0
    %1099 = vmatmul.mubr.f32.gmra.mrb[0].mxu0 %v1029
    %v1100 = vpop.f32.mrb[0].mxu0
    %v1101 = vadd.f32 %v353, %v1100
    %v1102 = vpop.f32.mrb[0].mxu0
    %1103 = vdwg.mxu0
    %v1104 = vsel %vm354, %v1101, -inf
    %1105 = vmax.xlane.f32.xlu0 %v1104
    %v1106 = vpop.xlane.xlu0 %1105
    %v1107 = vsub.f32 %v1101, %v1106
    %v1108 = vmul.f32 %v1107, 1.442695
    %v1109 = vpow.pop %v1108
    %v1110 = vsel %vm354, %v1109, 0.0
    %1111 = vadd.xlane.f32.xlu0 %v1110
    %v1112 = vpop.xlane.xlu0 %1111
    %v1113 = vrcp.pop %v1112
    %v1114 = vmul.f32 %v1109, %v1113
    %v1116 = vsel %vm354, %v1114, 0
    %1118 = vmatprep.subr.mxu0 0.0
    %1119 = vmatpush1.msra.mxu0 %v345
    %1120 = vmatprep.subr.mxu0 0.0
    %1121 = vmatpush1.msra.mxu0 0.0
    %1122 = vmatprep.subr.mxu0 0.0
    %1123 = vmatpush1.msra.mxu0 0.0
    %1124 = vmatprep.subr.mxu0 0.0
    %1125 = vmatpush1.msra.mxu0 0.0
    %1126 = vmatprep.subr.mxu0 0.0
    %1127 = vmatpush1.msra.mxu0 0.0
    %1128 = vmatprep.subr.mxu0 0.0
    %1129 = vmatpush1.msra.mxu0 0.0
    %1130 = vmatprep.subr.mxu0 0.0
    %1131 = vmatpush1.msra.mxu0 0.0
    %1132 = vmatprep.subr.mxu0 0.0
    %1133 = vmatpush1.msra.mxu0 0.0
    %1134 = vmatprep.subr.mxu0 0.0
    %1135 = vmatpush1.msra.mxu0 0.0
    %1136 = vmatprep.subr.mxu0 0.0
    %1137 = vmatpush1.msra.mxu0 0.0
    %1138 = vmatprep.subr.mxu0 0.0
    %1139 = vmatpush1.msra.mxu0 0.0
    %1140 = vmatprep.subr.mxu0 0.0
    %1141 = vmatpush1.msra.mxu0 0.0
    %1142 = vmatprep.subr.mxu0 0.0
    %1143 = vmatpush1.msra.mxu0 0.0
    %1144 = vmatprep.subr.mxu0 0.0
    %1145 = vmatpush1.msra.mxu0 0.0
    %1146 = vmatprep.subr.mxu0 0.0
    %1147 = vmatpush1.msra.mxu0 0.0
    %1148 = vmatprep.subr.mxu0 0.0
    %1149 = vmatpush1.msra.mxu0 0.0
    %1150 = vmatprep.subr.mxu0 0.0
    %1151 = vmatpush1.msra.mxu0 0.0
    %1152 = vmatprep.subr.mxu0 0.0
    %1153 = vmatpush1.msra.mxu0 0.0
    %1154 = vmatprep.subr.mxu0 0.0
    %1155 = vmatpush1.msra.mxu0 0.0
    %1156 = vmatprep.subr.mxu0 0.0
    %1157 = vmatpush1.msra.mxu0 0.0
    %1158 = vmatprep.subr.mxu0 0.0
    %1159 = vmatpush1.msra.mxu0 0.0
    %1160 = vmatprep.subr.mxu0 0.0
    %1161 = vmatpush1.msra.mxu0 0.0
    %1162 = vmatprep.subr.mxu0 0.0
    %1163 = vmatpush1.msra.mxu0 0.0
    %1164 = vmatprep.subr.mxu0 0.0
    %1165 = vmatpush1.msra.mxu0 0.0
    %1166 = vmatprep.subr.mxu0 0.0
    %1167 = vmatpush1.msra.mxu0 0.0
    %1168 = vmatprep.subr.mxu0 0.0
    %1169 = vmatpush1.msra.mxu0 0.0
    %1170 = vmatprep.subr.mxu0 0.0
    %1171 = vmatpush1.msra.mxu0 0.0
    %1172 = vmatprep.subr.mxu0 0.0
    %1173 = vmatpush1.msra.mxu0 0.0
    %1174 = vmatprep.subr.mxu0 0.0
    %1175 = vmatpush1.msra.mxu0 0.0
    %1176 = vmatprep.subr.mxu0 0.0
    %1177 = vmatpush1.msra.mxu0 0.0
    %1178 = vmatprep.subr.mxu0 0.0
    %1179 = vmatpush1.msra.mxu0 0.0
    %1180 = vmatprep.subr.mxu0 0.0
    %1181 = vmatpush1.msra.mxu0 0.0
    %1182 = vmatprep.mubr.f32.mxu0 0.0
    %1183 = vmatmul.mubr.f32.gmra.mrb[0].mxu0 %v1116
    %v1184 = vpop.f32.mrb[0].mxu0
    %v1185 = vadd.f32 0.0, %v1184
    %v1186 = vpop.f32.mrb[0].mxu0
    %1187 = vdwg.mxu0
    %1188 = vrot.lane.b32.xlu0 %v135, 120
    %v1189 = vpop.permute.xlu0 %1188
    %1190 = vrot.lane.b32.xlu0 %v240, 120
    %v1191 = vpop.permute.xlu0 %1190
    %v1192 = vsel %vm354, %v1189, 0
    %v1194 = vsel %vm354, %v1191, 0
    %1196 = vmatprep.subr.mxu0 0.0
    %1197 = vmatpush1.xpose.msra.mxu0 %v1194
    %1198 = vmatprep.subr.mxu0 0.0
    %1199 = vmatpush1.xpose.msra.mxu0 0.0
    %1200 = vmatprep.subr.mxu0 0.0
    %1201 = vmatpush1.xpose.msra.mxu0 0.0
    %1202 = vmatprep.subr.mxu0 0.0
    %1203 = vmatpush1.xpose.msra.mxu0 0.0
    %1204 = vmatprep.subr.mxu0 0.0
    %1205 = vmatpush1.xpose.msra.mxu0 0.0
    %1206 = vmatprep.subr.mxu0 0.0
    %1207 = vmatpush1.xpose.msra.mxu0 0.0
    %1208 = vmatprep.subr.mxu0 0.0
    %1209 = vmatpush1.xpose.msra.mxu0 0.0
    %1210 = vmatprep.subr.mxu0 0.0
    %1211 = vmatpush1.xpose.msra.mxu0 0.0
    %1212 = vmatprep.subr.mxu0 0.0
    %1213 = vmatpush1.xpose.msra.mxu0 0.0
    %1214 = vmatprep.subr.mxu0 0.0
    %1215 = vmatpush1.xpose.msra.mxu0 0.0
    %1216 = vmatprep.subr.mxu0 0.0
    %1217 = vmatpush1.xpose.msra.mxu0 0.0
    %1218 = vmatprep.subr.mxu0 0.0
    %1219 = vmatpush1.xpose.msra.mxu0 0.0
    %1220 = vmatprep.subr.mxu0 0.0
    %1221 = vmatpush1.xpose.msra.mxu0 0.0
    %1222 = vmatprep.subr.mxu0 0.0
    %1223 = vmatpush1.xpose.msra.mxu0 0.0
    %1224 = vmatprep.subr.mxu0 0.0
    %1225 = vmatpush1.xpose.msra.mxu0 0.0
    %1226 = vmatprep.subr.mxu0 0.0
    %1227 = vmatpush1.xpose.msra.mxu0 0.0
    %1228 = vmatprep.subr.mxu0 0.0
    %1229 = vmatpush1.xpose.msra.mxu0 0.0
    %1230 = vmatprep.subr.mxu0 0.0
    %1231 = vmatpush1.xpose.msra.mxu0 0.0
    %1232 = vmatprep.subr.mxu0 0.0
    %1233 = vmatpush1.xpose.msra.mxu0 0.0
    %1234 = vmatprep.subr.mxu0 0.0
    %1235 = vmatpush1.xpose.msra.mxu0 0.0
    %1236 = vmatprep.subr.mxu0 0.0
    %1237 = vmatpush1.xpose.msra.mxu0 0.0
    %1238 = vmatprep.subr.mxu0 0.0
    %1239 = vmatpush1.xpose.msra.mxu0 0.0
    %1240 = vmatprep.subr.mxu0 0.0
    %1241 = vmatpush1.xpose.msra.mxu0 0.0
    %1242 = vmatprep.subr.mxu0 0.0
    %1243 = vmatpush1.xpose.msra.mxu0 0.0
    %1244 = vmatprep.subr.mxu0 0.0
    %1245 = vmatpush1.xpose.msra.mxu0 0.0
    %1246 = vmatprep.subr.mxu0 0.0
    %1247 = vmatpush1.xpose.msra.mxu0 0.0
    %1248 = vmatprep.subr.mxu0 0.0
    %1249 = vmatpush1.xpose.msra.mxu0 0.0
    %1250 = vmatprep.subr.mxu0 0.0
    %1251 = vmatpush1.xpose.msra.mxu0 0.0
    %1252 = vmatprep.subr.mxu0 0.0
    %1253 = vmatpush1.xpose.msra.mxu0 0.0
    %1254 = vmatprep.subr.mxu0 0.0
    %1255 = vmatpush1.xpose.msra.mxu0 0.0
    %1256 = vmatprep.subr.mxu0 0.0
    %1257 = vmatpush1.xpose.msra.mxu0 0.0
    %1258 = vmatprep.subr.mxu0 0.0
    %1259 = vmatpush1.xpose.msra.mxu0 0.0
    %1260 = vmatprep.mubr.f32.mxu0 0.0
    %1261 = vmatmul.mubr.f32.gmra.mrb[0].mxu0 %v1192
    %v1262 = vpop.f32.mrb[0].mxu0
    %v1263 = vadd.f32 %v353, %v1262
    %v1264 = vpop.f32.mrb[0].mxu0
    %1265 = vdwg.mxu0
    %v1266 = vsel %vm354, %v1263, -inf
    %1267 = vmax.xlane.f32.xlu0 %v1266
    %v1268 = vpop.xlane.xlu0 %1267
    %v1269 = vsub.f32 %v1263, %v1268
    %v1270 = vmul.f32 %v1269, 1.442695
    %v1271 = vpow.pop %v1270
    %v1272 = vsel %vm354, %v1271, 0.0
    %1273 = vadd.xlane.f32.xlu0 %v1272
    %v1274 = vpop.xlane.xlu0 %1273
    %v1275 = vrcp.pop %v1274
    %v1276 = vmul.f32 %v1271, %v1275
    %1278 = vrot.lane.b32.xlu0 %v345, 120
    %v1279 = vpop.permute.xlu0 %1278
    %v1282 = vsel %vm354, %v1276, 0
    %1284 = vmatprep.subr.mxu0 0.0
    %1285 = vmatpush1.msra.mxu0 %v1279
    %1286 = vmatprep.subr.mxu0 0.0
    %1287 = vmatpush1.msra.mxu0 0.0
    %1288 = vmatprep.subr.mxu0 0.0
    %1289 = vmatpush1.msra.mxu0 0.0
    %1290 = vmatprep.subr.mxu0 0.0
    %1291 = vmatpush1.msra.mxu0 0.0
    %1292 = vmatprep.subr.mxu0 0.0
    %1293 = vmatpush1.msra.mxu0 0.0
    %1294 = vmatprep.subr.mxu0 0.0
    %1295 = vmatpush1.msra.mxu0 0.0
    %1296 = vmatprep.subr.mxu0 0.0
    %1297 = vmatpush1.msra.mxu0 0.0
    %1298 = vmatprep.subr.mxu0 0.0
    %1299 = vmatpush1.msra.mxu0 0.0
    %1300 = vmatprep.subr.mxu0 0.0
    %1301 = vmatpush1.msra.mxu0 0.0
    %1302 = vmatprep.subr.mxu0 0.0
    %1303 = vmatpush1.msra.mxu0 0.0
    %1304 = vmatprep.subr.mxu0 0.0
    %1305 = vmatpush1.msra.mxu0 0.0
    %1306 = vmatprep.subr.mxu0 0.0
    %1307 = vmatpush1.msra.mxu0 0.0
    %1308 = vmatprep.subr.mxu0 0.0
    %1309 = vmatpush1.msra.mxu0 0.0
    %1310 = vmatprep.subr.mxu0 0.0
    %1311 = vmatpush1.msra.mxu0 0.0
    %1312 = vmatprep.subr.mxu0 0.0
    %1313 = vmatpush1.msra.mxu0 0.0
    %1314 = vmatprep.subr.mxu0 0.0
    %1315 = vmatpush1.msra.mxu0 0.0
    %1316 = vmatprep.subr.mxu0 0.0
    %1317 = vmatpush1.msra.mxu0 0.0
    %1318 = vmatprep.subr.mxu0 0.0
    %1319 = vmatpush1.msra.mxu0 0.0
    %1320 = vmatprep.subr.mxu0 0.0
    %1321 = vmatpush1.msra.mxu0 0.0
    %1322 = vmatprep.subr.mxu0 0.0
    %1323 = vmatpush1.msra.mxu0 0.0
    %1324 = vmatprep.subr.mxu0 0.0
    %1325 = vmatpush1.msra.mxu0 0.0
    %1326 = vmatprep.subr.mxu0 0.0
    %1327 = vmatpush1.msra.mxu0 0.0
    %1328 = vmatprep.subr.mxu0 0.0
    %1329 = vmatpush1.msra.mxu0 0.0
    %1330 = vmatprep.subr.mxu0 0.0
    %1331 = vmatpush1.msra.mxu0 0.0
    %1332 = vmatprep.subr.mxu0 0.0
    %1333 = vmatpush1.msra.mxu0 0.0
    %1334 = vmatprep.subr.mxu0 0.0
    %1335 = vmatpush1.msra.mxu0 0.0
    %1336 = vmatprep.subr.mxu0 0.0
    %1337 = vmatpush1.msra.mxu0 0.0
    %1338 = vmatprep.subr.mxu0 0.0
    %1339 = vmatpush1.msra.mxu0 0.0
    %1340 = vmatprep.subr.mxu0 0.0
    %1341 = vmatpush1.msra.mxu0 0.0
    %1342 = vmatprep.subr.mxu0 0.0
    %1343 = vmatpush1.msra.mxu0 0.0
    %1344 = vmatprep.subr.mxu0 0.0
    %1345 = vmatpush1.msra.mxu0 0.0
    %1346 = vmatprep.subr.mxu0 0.0
    %1347 = vmatpush1.msra.mxu0 0.0
    %1348 = vmatprep.mubr.f32.mxu0 0.0
    %1349 = vmatmul.mubr.f32.gmra.mrb[0].mxu0 %v1282
    %v1350 = vpop.f32.mrb[0].mxu0
    %v1351 = vadd.f32 0.0, %v1350
    %v1352 = vpop.f32.mrb[0].mxu0
    %1353 = vdwg.mxu0
    %1354 = vrot.lane.b32.xlu0 %v135, 112
    %v1355 = vpop.permute.xlu0 %1354
    %1356 = vrot.lane.b32.xlu0 %v240, 112
    %v1357 = vpop.permute.xlu0 %1356
    %v1358 = vsel %vm354, %v1355, 0
    %v1360 = vsel %vm354, %v1357, 0
    %1362 = vmatprep.subr.mxu0 0.0
    %1363 = vmatpush1.xpose.msra.mxu0 %v1360
    %1364 = vmatprep.subr.mxu0 0.0
    %1365 = vmatpush1.xpose.msra.mxu0 0.0
    %1366 = vmatprep.subr.mxu0 0.0
    %1367 = vmatpush1.xpose.msra.mxu0 0.0
    %1368 = vmatprep.subr.mxu0 0.0
    %1369 = vmatpush1.xpose.msra.mxu0 0.0
    %1370 = vmatprep.subr.mxu0 0.0
    %1371 = vmatpush1.xpose.msra.mxu0 0.0
    %1372 = vmatprep.subr.mxu0 0.0
    %1373 = vmatpush1.xpose.msra.mxu0 0.0
    %1374 = vmatprep.subr.mxu0 0.0
    %1375 = vmatpush1.xpose.msra.mxu0 0.0
    %1376 = vmatprep.subr.mxu0 0.0
    %1377 = vmatpush1.xpose.msra.mxu0 0.0
    %1378 = vmatprep.subr.mxu0 0.0
    %1379 = vmatpush1.xpose.msra.mxu0 0.0
    %1380 = vmatprep.subr.mxu0 0.0
    %1381 = vmatpush1.xpose.msra.mxu0 0.0
    %1382 = vmatprep.subr.mxu0 0.0
    %1383 = vmatpush1.xpose.msra.mxu0 0.0
    %1384 = vmatprep.subr.mxu0 0.0
    %1385 = vmatpush1.xpose.msra.mxu0 0.0
    %1386 = vmatprep.subr.mxu0 0.0
    %1387 = vmatpush1.xpose.msra.mxu0 0.0
    %1388 = vmatprep.subr.mxu0 0.0
    %1389 = vmatpush1.xpose.msra.mxu0 0.0
    %1390 = vmatprep.subr.mxu0 0.0
    %1391 = vmatpush1.xpose.msra.mxu0 0.0
    %1392 = vmatprep.subr.mxu0 0.0
    %1393 = vmatpush1.xpose.msra.mxu0 0.0
    %1394 = vmatprep.subr.mxu0 0.0
    %1395 = vmatpush1.xpose.msra.mxu0 0.0
    %1396 = vmatprep.subr.mxu0 0.0
    %1397 = vmatpush1.xpose.msra.mxu0 0.0
    %1398 = vmatprep.subr.mxu0 0.0
    %1399 = vmatpush1.xpose.msra.mxu0 0.0
    %1400 = vmatprep.subr.mxu0 0.0
    %1401 = vmatpush1.xpose.msra.mxu0 0.0
    %1402 = vmatprep.subr.mxu0 0.0
    %1403 = vmatpush1.xpose.msra.mxu0 0.0
    %1404 = vmatprep.subr.mxu0 0.0
    %1405 = vmatpush1.xpose.msra.mxu0 0.0
    %1406 = vmatprep.subr.mxu0 0.0
    %1407 = vmatpush1.xpose.msra.mxu0 0.0
    %1408 = vmatprep.subr.mxu0 0.0
    %1409 = vmatpush1.xpose.msra.mxu0 0.0
    %1410 = vmatprep.subr.mxu0 0.0
    %1411 = vmatpush1.xpose.msra.mxu0 0.0
    %1412 = vmatprep.subr.mxu0 0.0
    %1413 = vmatpush1.xpose.msra.mxu0 0.0
    %1414 = vmatprep.subr.mxu0 0.0
    %1415 = vmatpush1.xpose.msra.mxu0 0.0
    %1416 = vmatprep.subr.mxu0 0.0
    %1417 = vmatpush1.xpose.msra.mxu0 0.0
    %1418 = vmatprep.subr.mxu0 0.0
    %1419 = vmatpush1.xpose.msra.mxu0 0.0
    %1420 = vmatprep.subr.mxu0 0.0
    %1421 = vmatpush1.xpose.msra.mxu0 0.0
    %1422 = vmatprep.subr.mxu0 0.0
    %1423 = vmatpush1.xpose.msra.mxu0 0.0
    %1424 = vmatprep.subr.mxu0 0.0
    %1425 = vmatpush1.xpose.msra.mxu0 0.0
    %1426 = vmatprep.mubr.f32.mxu0 0.0
    %1427 = vmatmul.mubr.f32.gmra.mrb[0].mxu0 %v1358
    %v1428 = vpop.f32.mrb[0].mxu0
    %v1429 = vadd.f32 %v353, %v1428
    %v1430 = vpop.f32.mrb[0].mxu0
    %1431 = vdwg.mxu0
    %v1432 = vsel %vm354, %v1429, -inf
    %1433 = vmax.xlane.f32.xlu0 %v1432
    %v1434 = vpop.xlane.xlu0 %1433
    %v1435 = vsub.f32 %v1429, %v1434
    %v1436 = vmul.f32 %v1435, 1.442695
    %v1437 = vpow.pop %v1436
    %v1438 = vsel %vm354, %v1437, 0.0
    %1439 = vadd.xlane.f32.xlu0 %v1438
    %v1440 = vpop.xlane.xlu0 %1439
    %v1441 = vrcp.pop %v1440
    %v1442 = vmul.f32 %v1437, %v1441
    %1443 = vrot.lane.b32.xlu0 %v345, 112
    %v1444 = vpop.permute.xlu0 %1443
    %v1447 = vsel %vm354, %v1442, 0
    %1449 = vmatprep.subr.mxu0 0.0
    %1450 = vmatpush1.msra.mxu0 %v1444
    %1451 = vmatprep.subr.mxu0 0.0
    %1452 = vmatpush1.msra.mxu0 0.0
    %1453 = vmatprep.subr.mxu0 0.0
    %1454 = vmatpush1.msra.mxu0 0.0
    %1455 = vmatprep.subr.mxu0 0.0
    %1456 = vmatpush1.msra.mxu0 0.0
    %1457 = vmatprep.subr.mxu0 0.0
    %1458 = vmatpush1.msra.mxu0 0.0
    %1459 = vmatprep.subr.mxu0 0.0
    %1460 = vmatpush1.msra.mxu0 0.0
    %1461 = vmatprep.subr.mxu0 0.0
    %1462 = vmatpush1.msra.mxu0 0.0
    %1463 = vmatprep.subr.mxu0 0.0
    %1464 = vmatpush1.msra.mxu0 0.0
    %1465 = vmatprep.subr.mxu0 0.0
    %1466 = vmatpush1.msra.mxu0 0.0
    %1467 = vmatprep.subr.mxu0 0.0
    %1468 = vmatpush1.msra.mxu0 0.0
    %1469 = vmatprep.subr.mxu0 0.0
    %1470 = vmatpush1.msra.mxu0 0.0
    %1471 = vmatprep.subr.mxu0 0.0
    %1472 = vmatpush1.msra.mxu0 0.0
    %1473 = vmatprep.subr.mxu0 0.0
    %1474 = vmatpush1.msra.mxu0 0.0
    %1475 = vmatprep.subr.mxu0 0.0
    %1476 = vmatpush1.msra.mxu0 0.0
    %1477 = vmatprep.subr.mxu0 0.0
    %1478 = vmatpush1.msra.mxu0 0.0
    %1479 = vmatprep.subr.mxu0 0.0
    %1480 = vmatpush1.msra.mxu0 0.0
    %1481 = vmatprep.subr.mxu0 0.0
    %1482 = vmatpush1.msra.mxu0 0.0
    %1483 = vmatprep.subr.mxu0 0.0
    %1484 = vmatpush1.msra.mxu0 0.0
    %1485 = vmatprep.subr.mxu0 0.0
    %1486 = vmatpush1.msra.mxu0 0.0
    %1487 = vmatprep.subr.mxu0 0.0
    %1488 = vmatpush1.msra.mxu0 0.0
    %1489 = vmatprep.subr.mxu0 0.0
    %1490 = vmatpush1.msra.mxu0 0.0
    %1491 = vmatprep.subr.mxu0 0.0
    %1492 = vmatpush1.msra.mxu0 0.0
    %1493 = vmatprep.subr.mxu0 0.0
    %1494 = vmatpush1.msra.mxu0 0.0
    %1495 = vmatprep.subr.mxu0 0.0
    %1496 = vmatpush1.msra.mxu0 0.0
    %1497 = vmatprep.subr.mxu0 0.0
    %1498 = vmatpush1.msra.mxu0 0.0
    %1499 = vmatprep.subr.mxu0 0.0
    %1500 = vmatpush1.msra.mxu0 0.0
    %1501 = vmatprep.subr.mxu0 0.0
    %1502 = vmatpush1.msra.mxu0 0.0
    %1503 = vmatprep.subr.mxu0 0.0
    %1504 = vmatpush1.msra.mxu0 0.0
    %1505 = vmatprep.subr.mxu0 0.0
    %1506 = vmatpush1.msra.mxu0 0.0
    %1507 = vmatprep.subr.mxu0 0.0
    %1508 = vmatpush1.msra.mxu0 0.0
    %1509 = vmatprep.subr.mxu0 0.0
    %1510 = vmatpush1.msra.mxu0 0.0
    %1511 = vmatprep.subr.mxu0 0.0
    %1512 = vmatpush1.msra.mxu0 0.0
    %1513 = vmatprep.mubr.f32.mxu0 0.0
    %1514 = vmatmul.mubr.f32.gmra.mrb[0].mxu0 %v1447
    %v1515 = vpop.f32.mrb[0].mxu0
    %v1516 = vadd.f32 0.0, %v1515
    %v1517 = vpop.f32.mrb[0].mxu0
    %1518 = vdwg.mxu0
    %1519 = vrot.lane.b32.xlu0 %v135, 104
    %v1520 = vpop.permute.xlu0 %1519
    %1521 = vrot.lane.b32.xlu0 %v240, 104
    %v1522 = vpop.permute.xlu0 %1521
    %v1523 = vsel %vm354, %v1520, 0
    %v1525 = vsel %vm354, %v1522, 0
    %1527 = vmatprep.subr.mxu0 0.0
    %1528 = vmatpush1.xpose.msra.mxu0 %v1525
    %1529 = vmatprep.subr.mxu0 0.0
    %1530 = vmatpush1.xpose.msra.mxu0 0.0
    %1531 = vmatprep.subr.mxu0 0.0
    %1532 = vmatpush1.xpose.msra.mxu0 0.0
    %1533 = vmatprep.subr.mxu0 0.0
    %1534 = vmatpush1.xpose.msra.mxu0 0.0
    %1535 = vmatprep.subr.mxu0 0.0
    %1536 = vmatpush1.xpose.msra.mxu0 0.0
    %1537 = vmatprep.subr.mxu0 0.0
    %1538 = vmatpush1.xpose.msra.mxu0 0.0
    %1539 = vmatprep.subr.mxu0 0.0
    %1540 = vmatpush1.xpose.msra.mxu0 0.0
    %1541 = vmatprep.subr.mxu0 0.0
    %1542 = vmatpush1.xpose.msra.mxu0 0.0
    %1543 = vmatprep.subr.mxu0 0.0
    %1544 = vmatpush1.xpose.msra.mxu0 0.0
    %1545 = vmatprep.subr.mxu0 0.0
    %1546 = vmatpush1.xpose.msra.mxu0 0.0
    %1547 = vmatprep.subr.mxu0 0.0
    %1548 = vmatpush1.xpose.msra.mxu0 0.0
    %1549 = vmatprep.subr.mxu0 0.0
    %1550 = vmatpush1.xpose.msra.mxu0 0.0
    %1551 = vmatprep.subr.mxu0 0.0
    %1552 = vmatpush1.xpose.msra.mxu0 0.0
    %1553 = vmatprep.subr.mxu0 0.0
    %1554 = vmatpush1.xpose.msra.mxu0 0.0
    %1555 = vmatprep.subr.mxu0 0.0
    %1556 = vmatpush1.xpose.msra.mxu0 0.0
    %1557 = vmatprep.subr.mxu0 0.0
    %1558 = vmatpush1.xpose.msra.mxu0 0.0
    %1559 = vmatprep.subr.mxu0 0.0
    %1560 = vmatpush1.xpose.msra.mxu0 0.0
    %1561 = vmatprep.subr.mxu0 0.0
    %1562 = vmatpush1.xpose.msra.mxu0 0.0
    %1563 = vmatprep.subr.mxu0 0.0
    %1564 = vmatpush1.xpose.msra.mxu0 0.0
    %1565 = vmatprep.subr.mxu0 0.0
    %1566 = vmatpush1.xpose.msra.mxu0 0.0
    %1567 = vmatprep.subr.mxu0 0.0
    %1568 = vmatpush1.xpose.msra.mxu0 0.0
    %1569 = vmatprep.subr.mxu0 0.0
    %1570 = vmatpush1.xpose.msra.mxu0 0.0
    %1571 = vmatprep.subr.mxu0 0.0
    %1572 = vmatpush1.xpose.msra.mxu0 0.0
    %1573 = vmatprep.subr.mxu0 0.0
    %1574 = vmatpush1.xpose.msra.mxu0 0.0
    %1575 = vmatprep.subr.mxu0 0.0
    %1576 = vmatpush1.xpose.msra.mxu0 0.0
    %1577 = vmatprep.subr.mxu0 0.0
    %1578 = vmatpush1.xpose.msra.mxu0 0.0
    %1579 = vmatprep.subr.mxu0 0.0
    %1580 = vmatpush1.xpose.msra.mxu0 0.0
    %1581 = vmatprep.subr.mxu0 0.0
    %1582 = vmatpush1.xpose.msra.mxu0 0.0
    %1583 = vmatprep.subr.mxu0 0.0
    %1584 = vmatpush1.xpose.msra.mxu0 0.0
    %1585 = vmatprep.subr.mxu0 0.0
    %1586 = vmatpush1.xpose.msra.mxu0 0.0
    %1587 = vmatprep.subr.mxu0 0.0
    %1588 = vmatpush1.xpose.msra.mxu0 0.0
    %1589 = vmatprep.subr.mxu0 0.0
    %1590 = vmatpush1.xpose.msra.mxu0 0.0
    %1591 = vmatprep.mubr.f32.mxu0 0.0
    %1592 = vmatmul.mubr.f32.gmra.mrb[0].mxu0 %v1523
    %v1593 = vpop.f32.mrb[0].mxu0
    %v1594 = vadd.f32 %v353, %v1593
    %v1595 = vpop.f32.mrb[0].mxu0
    %1596 = vdwg.mxu0
    %v1597 = vsel %vm354, %v1594, -inf
    %1598 = vmax.xlane.f32.xlu0 %v1597
    %v1599 = vpop.xlane.xlu0 %1598
    %v1600 = vsub.f32 %v1594, %v1599
    %v1601 = vmul.f32 %v1600, 1.442695
    %v1602 = vpow.pop %v1601
    %v1603 = vsel %vm354, %v1602, 0.0
    %1604 = vadd.xlane.f32.xlu0 %v1603
    %v1605 = vpop.xlane.xlu0 %1604
    %v1606 = vrcp.pop %v1605
    %v1607 = vmul.f32 %v1602, %v1606
    %1608 = vrot.lane.b32.xlu0 %v345, 104
    %v1609 = vpop.permute.xlu0 %1608
    %v1612 = vsel %vm354, %v1607, 0
    %1614 = vmatprep.subr.mxu0 0.0
    %1615 = vmatpush1.msra.mxu0 %v1609
    %1616 = vmatprep.subr.mxu0 0.0
    %1617 = vmatpush1.msra.mxu0 0.0
    %1618 = vmatprep.subr.mxu0 0.0
    %1619 = vmatpush1.msra.mxu0 0.0
    %1620 = vmatprep.subr.mxu0 0.0
    %1621 = vmatpush1.msra.mxu0 0.0
    %1622 = vmatprep.subr.mxu0 0.0
    %1623 = vmatpush1.msra.mxu0 0.0
    %1624 = vmatprep.subr.mxu0 0.0
    %1625 = vmatpush1.msra.mxu0 0.0
    %1626 = vmatprep.subr.mxu0 0.0
    %1627 = vmatpush1.msra.mxu0 0.0
    %1628 = vmatprep.subr.mxu0 0.0
    %1629 = vmatpush1.msra.mxu0 0.0
    %1630 = vmatprep.subr.mxu0 0.0
    %1631 = vmatpush1.msra.mxu0 0.0
    %1632 = vmatprep.subr.mxu0 0.0
    %1633 = vmatpush1.msra.mxu0 0.0
    %1634 = vmatprep.subr.mxu0 0.0
    %1635 = vmatpush1.msra.mxu0 0.0
    %1636 = vmatprep.subr.mxu0 0.0
    %1637 = vmatpush1.msra.mxu0 0.0
    %1638 = vmatprep.subr.mxu0 0.0
    %1639 = vmatpush1.msra.mxu0 0.0
    %1640 = vmatprep.subr.mxu0 0.0
    %1641 = vmatpush1.msra.mxu0 0.0
    %1642 = vmatprep.subr.mxu0 0.0
    %1643 = vmatpush1.msra.mxu0 0.0
    %1644 = vmatprep.subr.mxu0 0.0
    %1645 = vmatpush1.msra.mxu0 0.0
    %1646 = vmatprep.subr.mxu0 0.0
    %1647 = vmatpush1.msra.mxu0 0.0
    %1648 = vmatprep.subr.mxu0 0.0
    %1649 = vmatpush1.msra.mxu0 0.0
    %1650 = vmatprep.subr.mxu0 0.0
    %1651 = vmatpush1.msra.mxu0 0.0
    %1652 = vmatprep.subr.mxu0 0.0
    %1653 = vmatpush1.msra.mxu0 0.0
    %1654 = vmatprep.subr.mxu0 0.0
    %1655 = vmatpush1.msra.mxu0 0.0
    %1656 = vmatprep.subr.mxu0 0.0
    %1657 = vmatpush1.msra.mxu0 0.0
    %1658 = vmatprep.subr.mxu0 0.0
    %1659 = vmatpush1.msra.mxu0 0.0
    %1660 = vmatprep.subr.mxu0 0.0
    %1661 = vmatpush1.msra.mxu0 0.0
    %1662 = vmatprep.subr.mxu0 0.0
    %1663 = vmatpush1.msra.mxu0 0.0
    %1664 = vmatprep.subr.mxu0 0.0
    %1665 = vmatpush1.msra.mxu0 0.0
    %1666 = vmatprep.subr.mxu0 0.0
    %1667 = vmatpush1.msra.mxu0 0.0
    %1668 = vmatprep.subr.mxu0 0.0
    %1669 = vmatpush1.msra.mxu0 0.0
    %1670 = vmatprep.subr.mxu0 0.0
    %1671 = vmatpush1.msra.mxu0 0.0
    %1672 = vmatprep.subr.mxu0 0.0
    %1673 = vmatpush1.msra.mxu0 0.0
    %1674 = vmatprep.subr.mxu0 0.0
    %1675 = vmatpush1.msra.mxu0 0.0
    %1676 = vmatprep.subr.mxu0 0.0
    %1677 = vmatpush1.msra.mxu0 0.0
    %1678 = vmatprep.mubr.f32.mxu0 0.0
    %1679 = vmatmul.mubr.f32.gmra.mrb[0].mxu0 %v1612
    %v1680 = vpop.f32.mrb[0].mxu0
    %v1681 = vadd.f32 0.0, %v1680
    %v1682 = vpop.f32.mrb[0].mxu0
    %1683 = vdwg.mxu0
    %1685 = vrot.lane.b32.xlu0 %v1351, 8
    %v1686 = vpop.permute.xlu0 %1685
    %1689 = vrot.lane.b32.xlu0 %v1516, 16
    %v1690 = vpop.permute.xlu0 %1689
    %1693 = vrot.lane.b32.xlu0 %v1681, 24
    %v1694 = vpop.permute.xlu0 %1693
    %v1696 = vsel %vm354, %v1185, %v1686
    %v1697 = vsel %vm1024, %v1696, %v1690
    %v1698 = vsel %vm1026, %v1697, %v1694
    %v1699 = vpack.c.bf16 %v1698, %v1027
    %v1700 = vld [vmem:[%s4] sm:$0xf]
    %v1701 = vld [vmem:[%s4 + $0x4] sm:$0xf]
    %v1702 = vld [vmem:[%s4 + $0x8] sm:$0xf]
    %v1703 = vld [vmem:[%s4 + $0xc] sm:$0xf]
    %v1704 = vld [vmem:[%s5] sm:$0x1]
    %v1706 = vlaneseq
    %v1707 = vshrl.u32 %v1706, 7
    %v1708 = vsub.s32 0, %v1707
    %v1709 = vrot.slane %v1704, %v1708
    %v1715 = vunpack.c.l.b16 %v1700
    %v1716 = vunpack.c.l.b16 %v1701
    %v1717 = vunpack.c.l.b16 %v1702
    %v1718 = vunpack.c.l.b16 %v1703
    %v1719 = vpack.c.b16 %v1716, %v1715
    %v1720 = vpack.c.b16 %v1718, %v1717
    %vm1723 = vcmask 261120
    %v1725 = vsel %vm1723, %v1699, 0
    %1727 = vmatprep.subr.bf16.mxu0 0
    %1728 = vmatpush1.bf16.msra.mxu0 %v1719
    %1729 = vmatprep.subr.bf16.mxu0 0
    %1730 = vmatpush1.bf16.msra.mxu0 %v1720
    %1731 = vmatprep.subr.bf16.mxu0 0
    %1732 = vmatpush1.bf16.msra.mxu0 0
    %1733 = vmatprep.subr.bf16.mxu0 0
    %1734 = vmatpush1.bf16.msra.mxu0 0
    %1735 = vmatprep.subr.bf16.mxu0 0
    %1736 = vmatpush1.bf16.msra.mxu0 0
    %1737 = vmatprep.subr.bf16.mxu0 0
    %1738 = vmatpush1.bf16.msra.mxu0 0
    %1739 = vmatprep.subr.bf16.mxu0 0
    %1740 = vmatpush1.bf16.msra.mxu0 0
    %1741 = vmatprep.subr.bf16.mxu0 0
    %1742 = vmatpush1.bf16.msra.mxu0 0
    %1743 = vmatprep.subr.bf16.mxu0 0
    %1744 = vmatpush1.bf16.msra.mxu0 0
    %1745 = vmatprep.subr.bf16.mxu0 0
    %1746 = vmatpush1.bf16.msra.mxu0 0
    %1747 = vmatprep.subr.bf16.mxu0 0
    %1748 = vmatpush1.bf16.msra.mxu0 0
    %1749 = vmatprep.subr.bf16.mxu0 0
    %1750 = vmatpush1.bf16.msra.mxu0 0
    %1751 = vmatprep.subr.bf16.mxu0 0
    %1752 = vmatpush1.bf16.msra.mxu0 0
    %1753 = vmatprep.subr.bf16.mxu0 0
    %1754 = vmatpush1.bf16.msra.mxu0 0
    %1755 = vmatprep.subr.bf16.mxu0 0
    %1756 = vmatpush1.bf16.msra.mxu0 0
    %1757 = vmatprep.subr.bf16.mxu0 0
    %1758 = vmatpush1.bf16.msra.mxu0 0
    %1759 = vmatprep.mubr.bf16.mxu0 0
    %1760 = vmatmul.mubr.bf16.gmra.mrb[0].mxu0 %v1725
    %v1761 = vpop.f32.mrb[0].mxu0
    %v1762 = vadd.f32 %v1709, %v1761
    %v1763 = vpop.f32.mrb[0].mxu0
    %v1764 = vpop.f32.mrb[0].mxu0
    %v1765 = vadd.f32 %v1709, %v1764
    %v1766 = vpop.f32.mrb[0].mxu0
    %1767 = vdwg.mxu0
    %1768 = vst [vmem:[#allocation2] sm:$0xff] %v1762
    %1769 = vst [vmem:[#allocation2 + $0x8] sm:$0xff] %v1765
    // Predicated region
    $region26: #{tpu_custom_call.1} parent=1 // pred_check
      _
    $region27: #{tpu_custom_call.1} parent=1 // pred_check_branch
      %1771 = sbr.rel (0) target = $region29
    $region28: #{tpu_custom_call.1} parent=1 // pred_region
      %s1773 = ssub.s32 256, 256
      %1774 = vsyncadd [#allocation3], %s1773
      %s1775 = sshll.u32 [#allocation2], 4
      %s1776 = int_to_ptr.vmem [resolvable:$true] %s1775
      %1781 = dma.vmem_to_hbm [thread:$0]  %s1776, 256, %s6, [#allocation3], 128, 128, 8
    $region29: #{tpu_custom_call.1} parent=1 // pred_fallthru
      _
    // Predicated region
    $region30: #{tpu_custom_call.1} parent=1 // pred_check
      _
    $region31: #{tpu_custom_call.1} parent=1 // pred_check_branch
      %1783 = sbr.rel (0) target = $region33
    $region32: #{tpu_custom_call.1} parent=1 // pred_region
      %1784 = dma.done [#allocation3], 256
    $region33: #{tpu_custom_call.1} parent=1 // pred_fallthru
      _
    %1785 = vsyncpa [#allocation3], 1

</llo_original>
